<compile_context>
chip_gen: v6e
topology: v6e:2x2x1
jax: 0.10.0
libtpu: 0.0.40
codegen_flags: <defaults>
</compile_context>

<pallas_src>
import functools

import jax
import jax.numpy as jnp
import numpy as np
from jax.experimental import pallas as pl
from jax.experimental.pallas import tpu as pltpu

# Vocab tile (lanes) for the output projection. Multiple of 128; 2048 amortizes the
# fixed per-grid-step cost to a few percent at real vocab sizes (sweepable 1024-4096).
_VOCAB_TILE = 2048


def _round_up(x, m):
    return (x + m - 1) // m * m


def _vocab_tile_for(v):
    # Largest tile <= _VOCAB_TILE that the padded vocab is a multiple of.
    return min(_VOCAB_TILE, _round_up(v, 128))


def _vmem_limit_bytes(working_bytes):
    # Stay below v7x's 64 MiB physical VMEM; on v5e/v6e (128 MiB physical) this could
    # be raised toward ~96 MiB when pushing the vocab tile / hidden size further.
    return int(min(64 * 1024 * 1024, max(32 * 1024 * 1024, working_bytes)))


# --------------------------------------------------------------------------------------
# Kernels
# --------------------------------------------------------------------------------------

def _lstm_step_kernel(ids_ref,                 # SMEM (B,)   int32  (scalar prefetch)
                      emb_ref,                 # HBM  (V,Hp) f32    (pl.ANY, DMA gather)
                      wx_ref,                  # VMEM (Hp,4Hp) bf16 input-half gates
                      wh_ref,                  # VMEM (Hp,4Hp) bf16 recurrent-half gates
                      bg_ref,                  # VMEM (1,4Hp)  f32  b_ih + b_hh (padded)
                      h0_ref, c0_ref,          # VMEM (B,Hp)   f32  padded state (aliased)
                      h_ref, c_ref,            # VMEM (B,Hp)   f32  out (in-place update)
                      hbf_ref,                 # VMEM (B,Hp)   bf16 out (for projection)
                      x_scr,                   # VMEM (B,Hp)   f32  gathered embeddings
                      sems,                    # DMA semaphores (B,)
                      *, vocab_size):
    Hp = h0_ref.shape[1]
    B = x_scr.shape[0]

    # 1) Launch the B embedding-row gathers (ids arrive on the SMEM scalar path).
    rows = [jnp.clip(ids_ref[b], 0, vocab_size - 1) for b in range(B)]
    copies = [pltpu.make_async_copy(emb_ref.at[rows[b]], x_scr.at[b], sems.at[b])
              for b in range(B)]
    for cp in copies:
        cp.start()

    # 2) Recurrent half of the fused gate matmul while the gathers are in flight.
    h0 = h0_ref[...]
    c0 = c0_ref[...]
    gates = jnp.dot(h0.astype(jnp.bfloat16), wh_ref[...],
                    preferred_element_type=jnp.float32) + bg_ref[...]

    # 3) Wait on the SAME descriptors, then add the input half (no lane concatenate).
    for cp in copies:
        cp.wait()
    gates = gates + jnp.dot(x_scr[...].astype(jnp.bfloat16), wx_ref[...],
                            preferred_element_type=jnp.float32)

    # 4) LSTM cell (PyTorch gate order i, f, g, o); each gate occupies its own
    #    128-lane-aligned region, element-wise math stays f32.
    i_g = jax.nn.sigmoid(gates[:, 0 * Hp:1 * Hp])
    f_g = jax.nn.sigmoid(gates[:, 1 * Hp:2 * Hp])
    g_g = jnp.tanh(gates[:, 2 * Hp:3 * Hp])
    o_g = jax.nn.sigmoid(gates[:, 3 * Hp:4 * Hp])
    c_new = f_g * c0 + i_g * g_g
    h_new = o_g * jnp.tanh(c_new)

    h_ref[...] = h_new                           # lane-dense, aliased with h0
    c_ref[...] = c_new                           # aliased with c0
    hbf_ref[...] = h_new.astype(jnp.bfloat16)    # cast once; reused by every vocab tile


def _proj_kernel(hbf_ref,                      # VMEM (B, Hp) bf16
                 wo_ref,                       # VMEM (Hp, TV) bf16  W_out^T vocab tile
                 bo_ref,                       # VMEM (1, TV)  f32
                 logits_ref):                  # VMEM (B, TV)  f32   lane-dense
    logits_ref[...] = (jnp.dot(hbf_ref[...], wo_ref[...],
                               preferred_element_type=jnp.float32) + bo_ref[...])


# --------------------------------------------------------------------------------------
# Parameter prep (one-time, hoisted out of the per-token path)
# --------------------------------------------------------------------------------------

def prepare_params(params):
    """Transpose, split input/recurrent gate weights, pre-add biases, pad gates to
    128-lane regions, pad the vocab to a multiple of the projection tile, cast to bf16."""
    emb = params["emb"]
    w_ih, w_hh = params["w_ih"], params["w_hh"]
    b_gates = params["b_ih"] + params["b_hh"]
    w_out, b_out = params["w_out"], params["b_out"]

    V, H = emb.shape
    Hp = _round_up(H, 128)
    TV = _vocab_tile_for(V)
    Vp = _round_up(V, TV)

    emb_p = jnp.zeros((V, Hp), jnp.float32).at[:, :H].set(emb)

    wx = jnp.zeros((Hp, 4 * Hp), jnp.float32)
    wh = jnp.zeros((Hp, 4 * Hp), jnp.float32)
    bg = jnp.zeros((1, 4 * Hp), jnp.float32)
    for g in range(4):   # PyTorch gate order i, f, g, o
        wx = wx.at[:H, g * Hp:g * Hp + H].set(w_ih[g * H:(g + 1) * H, :].T)
        wh = wh.at[:H, g * Hp:g * Hp + H].set(w_hh[g * H:(g + 1) * H, :].T)
        bg = bg.at[0, g * Hp:g * Hp + H].set(b_gates[g * H:(g + 1) * H])

    wo = jnp.zeros((Hp, Vp), jnp.float32).at[:H, :V].set(w_out.T)
    bo = jnp.zeros((1, Vp), jnp.float32).at[0, :V].set(b_out)

    return {
        "emb": emb_p,                            # f32, HBM-resident; B rows gathered/step
        "w_x_t": wx.astype(jnp.bfloat16),        # (Hp, 4Hp)
        "w_h_t": wh.astype(jnp.bfloat16),        # (Hp, 4Hp)
        "b_gates": bg,                           # (1, 4Hp) f32
        "w_out_t": wo.astype(jnp.bfloat16),      # (Hp, Vp)
        "b_out": bo,                             # (1, Vp) f32
    }


# --------------------------------------------------------------------------------------
# Per-token decode step (padded-state API — use this directly in autoregressive loops)
# --------------------------------------------------------------------------------------

def _decoder_step(prep, input_ids, h0_pad, c0_pad):
    """One decode step on PADDED state.  h0_pad/c0_pad: (B, Hp) f32.
    Returns (logits (B, V) f32, h_new (B, Hp) f32, c_new (B, Hp) f32).  Keeping the
    state padded across steps makes the in-place alias a true donation and avoids
    per-token pad/slice ops."""
    emb = prep["emb"]
    wx, wh, bg = prep["w_x_t"], prep["w_h_t"], prep["b_gates"]
    wo, bo = prep["w_out_t"], prep["b_out"]

    V, Hp = emb.shape
    Vp = wo.shape[1]
    TV = _vocab_tile_for(Vp)
    B = h0_pad.shape[0]
    ids = input_ids.astype(jnp.int32)

    # ---------------- call 1: embedding gather + fused LSTM step --------------------
    lstm_call = pl.pallas_call(
        functools.partial(_lstm_step_kernel, vocab_size=V),
        grid_spec=pltpu.PrefetchScalarGridSpec(
            num_scalar_prefetch=1,                    # ids -> SMEM scalar path
            grid=(1,),
            in_specs=[
                pl.BlockSpec(memory_space=pl.ANY),                      # emb stays in HBM
                pl.BlockSpec((Hp, 4 * Hp), lambda i, ids: (0, 0)),      # W_x^T
                pl.BlockSpec((Hp, 4 * Hp), lambda i, ids: (0, 0)),      # W_h^T
                pl.BlockSpec((1, 4 * Hp), lambda i, ids: (0, 0)),       # fused bias
                pl.BlockSpec((B, Hp), lambda i, ids: (0, 0)),           # h0 (padded)
                pl.BlockSpec((B, Hp), lambda i, ids: (0, 0)),           # c0 (padded)
            ],
            out_specs=(
                pl.BlockSpec((B, Hp), lambda i, ids: (0, 0)),           # h_new
                pl.BlockSpec((B, Hp), lambda i, ids: (0, 0)),           # c_new
                pl.BlockSpec((B, Hp), lambda i, ids: (0, 0)),           # h_new (bf16)
            ),
            scratch_shapes=[
                pltpu.VMEM((B, Hp), jnp.float32),     # gathered embedding rows
                pltpu.SemaphoreType.DMA((B,)),        # one DMA semaphore per row
            ],
        ),
        out_shape=(
            jax.ShapeDtypeStruct((B, Hp), jnp.float32),
            jax.ShapeDtypeStruct((B, Hp), jnp.float32),
            jax.ShapeDtypeStruct((B, Hp), jnp.bfloat16),
        ),
        # flat input order: 0=ids 1=emb 2=wx 3=wh 4=bg 5=h0 6=c0
        input_output_aliases={5: 0, 6: 1},            # in-place recurrent-state update
        compiler_params=pltpu.CompilerParams(
            dimension_semantics=("arbitrary",),
            vmem_limit_bytes=_vmem_limit_bytes(
                3 * (2 * Hp * 4 * Hp * 2)      # W_x^T + W_h^T (bf16) double-buffered +50%
                + 16 * B * Hp * 4),            # state / scratch / outputs headroom
        ),
    )
    h_new, c_new, h_bf = lstm_call(ids, emb, wx, wh, bg, h0_pad, c0_pad)

    # ---------------- call 2: vocab-tiled output projection -------------------------
    # "parallel": tiles are independent (h_bf is read-only), so v7x megacore shards the
    # W_out stream across both TensorCores; on v5e/v6e (1 TC) it is a no-op.
    proj_call = pl.pallas_call(
        _proj_kernel,
        grid=(Vp // TV,),
        in_specs=[
            pl.BlockSpec((B, Hp), lambda j: (0, 0)),        # h (bf16, tiny, re-used)
            pl.BlockSpec((Hp, TV), lambda j: (0, j)),       # W_out^T vocab tile
            pl.BlockSpec((1, TV), lambda j: (0, j)),        # b_out vocab tile
        ],
        out_specs=pl.BlockSpec((B, TV), lambda j: (0, j)),  # lane-dense logits tile
        out_shape=jax.ShapeDtypeStruct((B, Vp), jnp.float32),
        compiler_params=pltpu.CompilerParams(
            dimension_semantics=("parallel",),
            vmem_limit_bytes=_vmem_limit_bytes(
                3 * (Hp * TV * 2)              # W_out tile (bf16) double-buffered +50%
                + 3 * (B * TV * 4)             # logits tile double-buffered +50%
                + 2 * TV * 4 + B * Hp * 2),
        ),
    )
    logits_p = proj_call(h_bf, wo, bo)

    return logits_p[:, :V], h_new, c_new


# --------------------------------------------------------------------------------------
# PyTorch-shaped wrapper
# --------------------------------------------------------------------------------------

def decoder_forward(prep, input_ids, hidden):
    """Mirrors Decoder.forward(input_, hidden): returns (out, (h_n, c_n)) with out shaped
    (1, 1, B, V).  The reference module's Softmax(dim=1) over the singleton axis is kept
    exact (it makes `out` identically 1.0)."""
    h0, c0 = hidden
    B = input_ids.shape[0]
    H = h0.shape[-1]
    Hp = prep["w_x_t"].shape[0]

    h0_pad = jnp.zeros((B, Hp), jnp.float32).at[:, :H].set(h0.reshape(B, H))
    c0_pad = jnp.zeros((B, Hp), jnp.float32).at[:, :H].set(c0.reshape(B, H))

    logits, h_new, c_new = _decoder_step(prep, input_ids, h0_pad, c0_pad)
    out = jax.nn.softmax(logits[None, None, :, :], axis=1)   # degenerate, matches PyTorch
    return out, (h_new[None, :, :H], c_new[None, :, :H])


# --------------------------------------------------------------------------------------
# Pure-JAX reference (same bf16 weight casts as the kernel) + synthetic init
# --------------------------------------------------------------------------------------

def _reference_step(prep, input_ids, h0_pad, c0_pad):
    emb = prep["emb"]
    wx, wh, bg = prep["w_x_t"], prep["w_h_t"], prep["b_gates"]
    wo, bo = prep["w_out_t"], prep["b_out"]
    V, Hp = emb.shape

    x = emb[jnp.clip(input_ids, 0, V - 1)]                                  # (B, Hp) f32
    gates = (jnp.dot(h0_pad.astype(jnp.bfloat16), wh, preferred_element_type=jnp.float32)
             + bg
             + jnp.dot(x.astype(jnp.bfloat16), wx, preferred_element_type=jnp.float32))
    i_g = jax.nn.sigmoid(gates[:, 0 * Hp:1 * Hp])
    f_g = jax.nn.sigmoid(gates[:, 1 * Hp:2 * Hp])
    g_g = jnp.tanh(gates[:, 2 * Hp:3 * Hp])
    o_g = jax.nn.sigmoid(gates[:, 3 * Hp:4 * Hp])
    c_new = f_g * c0_pad + i_g * g_g
    h_new = o_g * jnp.tanh(c_new)
    logits = jnp.dot(h_new.astype(jnp.bfloat16), wo,
                     preferred_element_type=jnp.float32) + bo
    return logits[:, :V], h_new, c_new


def init_params(key, voc_size, hidden_size):
    """Deterministic synthetic init (PyTorch-style uniform(-1/sqrt(H), 1/sqrt(H)))."""
    H, V = hidden_size, voc_size
    ks = jax.random.split(key, 7)
    bound = 1.0 / (H ** 0.5)
    u = lambda k, shape: jax.random.uniform(k, shape, jnp.float32, -bound, bound)
    return {
        "emb": jax.random.normal(ks[0], (V, H), jnp.float32),  # Embedding ~ N(0,1)
        "w_ih": u(ks[1], (4 * H, H)),
        "w_hh": u(ks[2], (4 * H, H)),
        "b_ih": u(ks[3], (4 * H,)),
        "b_hh": u(ks[4], (4 * H,)),
        "w_out": u(ks[5], (V, H)),
        "b_out": u(ks[6], (V,)),
    }


if __name__ == "__main__":
    VOC_SIZE = 128
    HIDDEN_SIZE = 32
    BATCH = 8   # TODO(synk): pad toward the MXU row dim (128/256) when more batch exists.

    key = jax.random.PRNGKey(0)
    k_params, k_ids, k_h, k_c = jax.random.split(key, 4)

    params = init_params(k_params, VOC_SIZE, HIDDEN_SIZE)
    prep = prepare_params(params)   # one-time: transpose/split/pad/bf16-cast

    input_ids = jax.random.randint(k_ids, (BATCH,), 0, VOC_SIZE, jnp.int32)
    h0 = jax.random.normal(k_h, (1, BATCH, HIDDEN_SIZE), jnp.float32)
    c0 = jax.random.normal(k_c, (1, BATCH, HIDDEN_SIZE), jnp.float32)

    out, (h_n, c_n) = jax.jit(decoder_forward)(prep, input_ids, (h0, c0))
    jax.block_until_ready((out, h_n, c_n))

    assert out.shape == (1, 1, BATCH, VOC_SIZE)
    assert h_n.shape == (1, BATCH, HIDDEN_SIZE)
    assert c_n.shape == (1, BATCH, HIDDEN_SIZE)

    # Numerical check of the kernels (gather + LSTM + projection) vs pure JAX, on the
    # padded-state API used for autoregressive decode.
    Hp = prep["w_x_t"].shape[0]
    h0_pad = jnp.zeros((BATCH, Hp), jnp.float32).at[:, :HIDDEN_SIZE].set(
        h0.reshape(BATCH, HIDDEN_SIZE))
    c0_pad = jnp.zeros((BATCH, Hp), jnp.float32).at[:, :HIDDEN_SIZE].set(
        c0.reshape(BATCH, HIDDEN_SIZE))
    logits_k, h_k, c_k = jax.jit(_decoder_step)(prep, input_ids, h0_pad, c0_pad)
    logits_r, h_r, c_r = _reference_step(prep, input_ids, h0_pad, c0_pad)
    np.testing.assert_allclose(np.asarray(h_k), np.asarray(h_r), atol=1e-2, rtol=1e-2)
    np.testing.assert_allclose(np.asarray(c_k), np.asarray(c_r), atol=1e-2, rtol=1e-2)
    np.testing.assert_allclose(np.asarray(logits_k), np.asarray(logits_r),
                               atol=1e-2, rtol=1e-2)

    print("KERNEL_OK")
</pallas_src>

<mosaic_0001>
module attributes {stable_mosaic.version = 11 : i64} {
  func.func @_lstm_step_kernel(%arg0: i32, %arg1: memref<8xi32, #tpu.memory_space<smem>>, %arg2: memref<128x128xf32, #tpu.memory_space<any>>, %arg3: memref<128x512xbf16, #tpu.memory_space<vmem>>, %arg4: memref<128x512xbf16, #tpu.memory_space<vmem>>, %arg5: memref<1x512xf32, #tpu.memory_space<vmem>>, %arg6: memref<8x128xf32, #tpu.memory_space<vmem>>, %arg7: memref<8x128xf32, #tpu.memory_space<vmem>>, %arg8: memref<8x128xf32, #tpu.memory_space<vmem>>, %arg9: memref<8x128xf32, #tpu.memory_space<vmem>>, %arg10: memref<8x128xbf16, #tpu.memory_space<vmem>>, %arg11: memref<8x128xf32, #tpu.memory_space<vmem>>, %arg12: memref<8x!tpu.dma_semaphore, #tpu.memory_space<semaphore_mem>>) attributes {dimension_semantics = [#tpu.dimension_semantics<arbitrary>], iteration_bounds = array<i64: 1>, scalar_prefetch = 1 : i64, scratch_operands = 2 : i64, tpu.core_type = #tpu.core_type<tc>, window_params = [{}, {pipeline_mode = #tpu.pipeline_mode<synchronous>, transform_indices = @transform_1, window_bounds = array<i64: 128, 512>}, {pipeline_mode = #tpu.pipeline_mode<synchronous>, transform_indices = @transform_2, window_bounds = array<i64: 128, 512>}, {pipeline_mode = #tpu.pipeline_mode<synchronous>, transform_indices = @transform_3, window_bounds = array<i64: 1, 512>}, {pipeline_mode = #tpu.pipeline_mode<synchronous>, transform_indices = @transform_4, window_bounds = array<i64: 8, 128>}, {pipeline_mode = #tpu.pipeline_mode<synchronous>, transform_indices = @transform_5, window_bounds = array<i64: 8, 128>}, {pipeline_mode = #tpu.pipeline_mode<synchronous>, transform_indices = @transform_6, window_bounds = array<i64: 8, 128>}, {pipeline_mode = #tpu.pipeline_mode<synchronous>, transform_indices = @transform_7, window_bounds = array<i64: 8, 128>}, {pipeline_mode = #tpu.pipeline_mode<synchronous>, transform_indices = @transform_8, window_bounds = array<i64: 8, 128>}]} {
    %c0 = arith.constant 0 : index
    %0 = memref.load %arg1[%c0] : memref<8xi32, #tpu.memory_space<smem>>
    %c0_i32 = arith.constant 0 : i32
    %c127_i32 = arith.constant 127 : i32
    %1 = arith.maxsi %c0_i32, %0 : i32
    %2 = arith.minsi %c127_i32, %1 : i32
    %c1 = arith.constant 1 : index
    %3 = memref.load %arg1[%c1] : memref<8xi32, #tpu.memory_space<smem>>
    %c0_i32_0 = arith.constant 0 : i32
    %c127_i32_1 = arith.constant 127 : i32
    %4 = arith.maxsi %c0_i32_0, %3 : i32
    %5 = arith.minsi %c127_i32_1, %4 : i32
    %c2 = arith.constant 2 : index
    %6 = memref.load %arg1[%c2] : memref<8xi32, #tpu.memory_space<smem>>
    %c0_i32_2 = arith.constant 0 : i32
    %c127_i32_3 = arith.constant 127 : i32
    %7 = arith.maxsi %c0_i32_2, %6 : i32
    %8 = arith.minsi %c127_i32_3, %7 : i32
    %c3 = arith.constant 3 : index
    %9 = memref.load %arg1[%c3] : memref<8xi32, #tpu.memory_space<smem>>
    %c0_i32_4 = arith.constant 0 : i32
    %c127_i32_5 = arith.constant 127 : i32
    %10 = arith.maxsi %c0_i32_4, %9 : i32
    %11 = arith.minsi %c127_i32_5, %10 : i32
    %c4 = arith.constant 4 : index
    %12 = memref.load %arg1[%c4] : memref<8xi32, #tpu.memory_space<smem>>
    %c0_i32_6 = arith.constant 0 : i32
    %c127_i32_7 = arith.constant 127 : i32
    %13 = arith.maxsi %c0_i32_6, %12 : i32
    %14 = arith.minsi %c127_i32_7, %13 : i32
    %c5 = arith.constant 5 : index
    %15 = memref.load %arg1[%c5] : memref<8xi32, #tpu.memory_space<smem>>
    %c0_i32_8 = arith.constant 0 : i32
    %c127_i32_9 = arith.constant 127 : i32
    %16 = arith.maxsi %c0_i32_8, %15 : i32
    %17 = arith.minsi %c127_i32_9, %16 : i32
    %c6 = arith.constant 6 : index
    %18 = memref.load %arg1[%c6] : memref<8xi32, #tpu.memory_space<smem>>
    %c0_i32_10 = arith.constant 0 : i32
    %c127_i32_11 = arith.constant 127 : i32
    %19 = arith.maxsi %c0_i32_10, %18 : i32
    %20 = arith.minsi %c127_i32_11, %19 : i32
    %c7 = arith.constant 7 : index
    %21 = memref.load %arg1[%c7] : memref<8xi32, #tpu.memory_space<smem>>
    %c0_i32_12 = arith.constant 0 : i32
    %c127_i32_13 = arith.constant 127 : i32
    %22 = arith.maxsi %c0_i32_12, %21 : i32
    %23 = arith.minsi %c127_i32_13, %22 : i32
    %c0_i32_14 = arith.constant 0 : i32
    %c0_i32_15 = arith.constant 0 : i32
    %c0_i32_16 = arith.constant 0 : i32
    %24 = tpu.memref_slice %arg2[%2, %c0_i32_16] : memref<128x128xf32, #tpu.memory_space<any>> -> memref<1x128xf32, #tpu.memory_space<any>>
    %25 = tpu.memref_squeeze %24 : memref<1x128xf32, #tpu.memory_space<any>> -> memref<128xf32, #tpu.memory_space<any>>
    %c0_i32_17 = arith.constant 0 : i32
    %26 = tpu.memref_slice %arg11[%c0_i32_14, %c0_i32_17] : memref<8x128xf32, #tpu.memory_space<vmem>> -> memref<1x128xf32, #tpu.memory_space<vmem>>
    %27 = tpu.memref_squeeze %26 : memref<1x128xf32, #tpu.memory_space<vmem>> -> memref<128xf32, #tpu.memory_space<vmem>>
    %28 = tpu.memref_slice %arg12[%c0_i32_15] : memref<8x!tpu.dma_semaphore, #tpu.memory_space<semaphore_mem>> -> memref<1x!tpu.dma_semaphore, #tpu.memory_space<semaphore_mem>>
    %29 = tpu.memref_squeeze %28 : memref<1x!tpu.dma_semaphore, #tpu.memory_space<semaphore_mem>> -> memref<!tpu.dma_semaphore, #tpu.memory_space<semaphore_mem>>
    tpu.enqueue_dma source(%25 : memref<128xf32, #tpu.memory_space<any>>) target(%27 : memref<128xf32, #tpu.memory_space<vmem>>) target_semaphore(%29 : memref<!tpu.dma_semaphore, #tpu.memory_space<semaphore_mem>>)
    %c1_i32 = arith.constant 1 : i32
    %c1_i32_18 = arith.constant 1 : i32
    %c0_i32_19 = arith.constant 0 : i32
    %30 = tpu.memref_slice %arg2[%5, %c0_i32_19] : memref<128x128xf32, #tpu.memory_space<any>> -> memref<1x128xf32, #tpu.memory_space<any>>
    %31 = tpu.memref_squeeze %30 : memref<1x128xf32, #tpu.memory_space<any>> -> memref<128xf32, #tpu.memory_space<any>>
    %c0_i32_20 = arith.constant 0 : i32
    %32 = tpu.memref_slice %arg11[%c1_i32, %c0_i32_20] : memref<8x128xf32, #tpu.memory_space<vmem>> -> memref<1x128xf32, #tpu.memory_space<vmem>>
    %33 = tpu.memref_squeeze %32 : memref<1x128xf32, #tpu.memory_space<vmem>> -> memref<128xf32, #tpu.memory_space<vmem>>
    %34 = tpu.memref_slice %arg12[%c1_i32_18] : memref<8x!tpu.dma_semaphore, #tpu.memory_space<semaphore_mem>> -> memref<1x!tpu.dma_semaphore, #tpu.memory_space<semaphore_mem>>
    %35 = tpu.memref_squeeze %34 : memref<1x!tpu.dma_semaphore, #tpu.memory_space<semaphore_mem>> -> memref<!tpu.dma_semaphore, #tpu.memory_space<semaphore_mem>>
    tpu.enqueue_dma source(%31 : memref<128xf32, #tpu.memory_space<any>>) target(%33 : memref<128xf32, #tpu.memory_space<vmem>>) target_semaphore(%35 : memref<!tpu.dma_semaphore, #tpu.memory_space<semaphore_mem>>)
    %c2_i32 = arith.constant 2 : i32
    %c2_i32_21 = arith.constant 2 : i32
    %c0_i32_22 = arith.constant 0 : i32
    %36 = tpu.memref_slice %arg2[%8, %c0_i32_22] : memref<128x128xf32, #tpu.memory_space<any>> -> memref<1x128xf32, #tpu.memory_space<any>>
    %37 = tpu.memref_squeeze %36 : memref<1x128xf32, #tpu.memory_space<any>> -> memref<128xf32, #tpu.memory_space<any>>
    %c0_i32_23 = arith.constant 0 : i32
    %38 = tpu.memref_slice %arg11[%c2_i32, %c0_i32_23] : memref<8x128xf32, #tpu.memory_space<vmem>> -> memref<1x128xf32, #tpu.memory_space<vmem>>
    %39 = tpu.memref_squeeze %38 : memref<1x128xf32, #tpu.memory_space<vmem>> -> memref<128xf32, #tpu.memory_space<vmem>>
    %40 = tpu.memref_slice %arg12[%c2_i32_21] : memref<8x!tpu.dma_semaphore, #tpu.memory_space<semaphore_mem>> -> memref<1x!tpu.dma_semaphore, #tpu.memory_space<semaphore_mem>>
    %41 = tpu.memref_squeeze %40 : memref<1x!tpu.dma_semaphore, #tpu.memory_space<semaphore_mem>> -> memref<!tpu.dma_semaphore, #tpu.memory_space<semaphore_mem>>
    tpu.enqueue_dma source(%37 : memref<128xf32, #tpu.memory_space<any>>) target(%39 : memref<128xf32, #tpu.memory_space<vmem>>) target_semaphore(%41 : memref<!tpu.dma_semaphore, #tpu.memory_space<semaphore_mem>>)
    %c3_i32 = arith.constant 3 : i32
    %c3_i32_24 = arith.constant 3 : i32
    %c0_i32_25 = arith.constant 0 : i32
    %42 = tpu.memref_slice %arg2[%11, %c0_i32_25] : memref<128x128xf32, #tpu.memory_space<any>> -> memref<1x128xf32, #tpu.memory_space<any>>
    %43 = tpu.memref_squeeze %42 : memref<1x128xf32, #tpu.memory_space<any>> -> memref<128xf32, #tpu.memory_space<any>>
    %c0_i32_26 = arith.constant 0 : i32
    %44 = tpu.memref_slice %arg11[%c3_i32, %c0_i32_26] : memref<8x128xf32, #tpu.memory_space<vmem>> -> memref<1x128xf32, #tpu.memory_space<vmem>>
    %45 = tpu.memref_squeeze %44 : memref<1x128xf32, #tpu.memory_space<vmem>> -> memref<128xf32, #tpu.memory_space<vmem>>
    %46 = tpu.memref_slice %arg12[%c3_i32_24] : memref<8x!tpu.dma_semaphore, #tpu.memory_space<semaphore_mem>> -> memref<1x!tpu.dma_semaphore, #tpu.memory_space<semaphore_mem>>
    %47 = tpu.memref_squeeze %46 : memref<1x!tpu.dma_semaphore, #tpu.memory_space<semaphore_mem>> -> memref<!tpu.dma_semaphore, #tpu.memory_space<semaphore_mem>>
    tpu.enqueue_dma source(%43 : memref<128xf32, #tpu.memory_space<any>>) target(%45 : memref<128xf32, #tpu.memory_space<vmem>>) target_semaphore(%47 : memref<!tpu.dma_semaphore, #tpu.memory_space<semaphore_mem>>)
    %c4_i32 = arith.constant 4 : i32
    %c4_i32_27 = arith.constant 4 : i32
    %c0_i32_28 = arith.constant 0 : i32
    %48 = tpu.memref_slice %arg2[%14, %c0_i32_28] : memref<128x128xf32, #tpu.memory_space<any>> -> memref<1x128xf32, #tpu.memory_space<any>>
    %49 = tpu.memref_squeeze %48 : memref<1x128xf32, #tpu.memory_space<any>> -> memref<128xf32, #tpu.memory_space<any>>
    %c0_i32_29 = arith.constant 0 : i32
    %50 = tpu.memref_slice %arg11[%c4_i32, %c0_i32_29] : memref<8x128xf32, #tpu.memory_space<vmem>> -> memref<1x128xf32, #tpu.memory_space<vmem>>
    %51 = tpu.memref_squeeze %50 : memref<1x128xf32, #tpu.memory_space<vmem>> -> memref<128xf32, #tpu.memory_space<vmem>>
    %52 = tpu.memref_slice %arg12[%c4_i32_27] : memref<8x!tpu.dma_semaphore, #tpu.memory_space<semaphore_mem>> -> memref<1x!tpu.dma_semaphore, #tpu.memory_space<semaphore_mem>>
    %53 = tpu.memref_squeeze %52 : memref<1x!tpu.dma_semaphore, #tpu.memory_space<semaphore_mem>> -> memref<!tpu.dma_semaphore, #tpu.memory_space<semaphore_mem>>
    tpu.enqueue_dma source(%49 : memref<128xf32, #tpu.memory_space<any>>) target(%51 : memref<128xf32, #tpu.memory_space<vmem>>) target_semaphore(%53 : memref<!tpu.dma_semaphore, #tpu.memory_space<semaphore_mem>>)
    %c5_i32 = arith.constant 5 : i32
    %c5_i32_30 = arith.constant 5 : i32
    %c0_i32_31 = arith.constant 0 : i32
    %54 = tpu.memref_slice %arg2[%17, %c0_i32_31] : memref<128x128xf32, #tpu.memory_space<any>> -> memref<1x128xf32, #tpu.memory_space<any>>
    %55 = tpu.memref_squeeze %54 : memref<1x128xf32, #tpu.memory_space<any>> -> memref<128xf32, #tpu.memory_space<any>>
    %c0_i32_32 = arith.constant 0 : i32
    %56 = tpu.memref_slice %arg11[%c5_i32, %c0_i32_32] : memref<8x128xf32, #tpu.memory_space<vmem>> -> memref<1x128xf32, #tpu.memory_space<vmem>>
    %57 = tpu.memref_squeeze %56 : memref<1x128xf32, #tpu.memory_space<vmem>> -> memref<128xf32, #tpu.memory_space<vmem>>
    %58 = tpu.memref_slice %arg12[%c5_i32_30] : memref<8x!tpu.dma_semaphore, #tpu.memory_space<semaphore_mem>> -> memref<1x!tpu.dma_semaphore, #tpu.memory_space<semaphore_mem>>
    %59 = tpu.memref_squeeze %58 : memref<1x!tpu.dma_semaphore, #tpu.memory_space<semaphore_mem>> -> memref<!tpu.dma_semaphore, #tpu.memory_space<semaphore_mem>>
    tpu.enqueue_dma source(%55 : memref<128xf32, #tpu.memory_space<any>>) target(%57 : memref<128xf32, #tpu.memory_space<vmem>>) target_semaphore(%59 : memref<!tpu.dma_semaphore, #tpu.memory_space<semaphore_mem>>)
    %c6_i32 = arith.constant 6 : i32
    %c6_i32_33 = arith.constant 6 : i32
    %c0_i32_34 = arith.constant 0 : i32
    %60 = tpu.memref_slice %arg2[%20, %c0_i32_34] : memref<128x128xf32, #tpu.memory_space<any>> -> memref<1x128xf32, #tpu.memory_space<any>>
    %61 = tpu.memref_squeeze %60 : memref<1x128xf32, #tpu.memory_space<any>> -> memref<128xf32, #tpu.memory_space<any>>
    %c0_i32_35 = arith.constant 0 : i32
    %62 = tpu.memref_slice %arg11[%c6_i32, %c0_i32_35] : memref<8x128xf32, #tpu.memory_space<vmem>> -> memref<1x128xf32, #tpu.memory_space<vmem>>
    %63 = tpu.memref_squeeze %62 : memref<1x128xf32, #tpu.memory_space<vmem>> -> memref<128xf32, #tpu.memory_space<vmem>>
    %64 = tpu.memref_slice %arg12[%c6_i32_33] : memref<8x!tpu.dma_semaphore, #tpu.memory_space<semaphore_mem>> -> memref<1x!tpu.dma_semaphore, #tpu.memory_space<semaphore_mem>>
    %65 = tpu.memref_squeeze %64 : memref<1x!tpu.dma_semaphore, #tpu.memory_space<semaphore_mem>> -> memref<!tpu.dma_semaphore, #tpu.memory_space<semaphore_mem>>
    tpu.enqueue_dma source(%61 : memref<128xf32, #tpu.memory_space<any>>) target(%63 : memref<128xf32, #tpu.memory_space<vmem>>) target_semaphore(%65 : memref<!tpu.dma_semaphore, #tpu.memory_space<semaphore_mem>>)
    %c7_i32 = arith.constant 7 : i32
    %c7_i32_36 = arith.constant 7 : i32
    %c0_i32_37 = arith.constant 0 : i32
    %66 = tpu.memref_slice %arg2[%23, %c0_i32_37] : memref<128x128xf32, #tpu.memory_space<any>> -> memref<1x128xf32, #tpu.memory_space<any>>
    %67 = tpu.memref_squeeze %66 : memref<1x128xf32, #tpu.memory_space<any>> -> memref<128xf32, #tpu.memory_space<any>>
    %c0_i32_38 = arith.constant 0 : i32
    %68 = tpu.memref_slice %arg11[%c7_i32, %c0_i32_38] : memref<8x128xf32, #tpu.memory_space<vmem>> -> memref<1x128xf32, #tpu.memory_space<vmem>>
    %69 = tpu.memref_squeeze %68 : memref<1x128xf32, #tpu.memory_space<vmem>> -> memref<128xf32, #tpu.memory_space<vmem>>
    %70 = tpu.memref_slice %arg12[%c7_i32_36] : memref<8x!tpu.dma_semaphore, #tpu.memory_space<semaphore_mem>> -> memref<1x!tpu.dma_semaphore, #tpu.memory_space<semaphore_mem>>
    %71 = tpu.memref_squeeze %70 : memref<1x!tpu.dma_semaphore, #tpu.memory_space<semaphore_mem>> -> memref<!tpu.dma_semaphore, #tpu.memory_space<semaphore_mem>>
    tpu.enqueue_dma source(%67 : memref<128xf32, #tpu.memory_space<any>>) target(%69 : memref<128xf32, #tpu.memory_space<vmem>>) target_semaphore(%71 : memref<!tpu.dma_semaphore, #tpu.memory_space<semaphore_mem>>)
    %c0_39 = arith.constant 0 : index
    %c0_40 = arith.constant 0 : index
    %72 = vector.load %arg6[%c0_39, %c0_40] : memref<8x128xf32, #tpu.memory_space<vmem>>, vector<8x128xf32>
    %c0_41 = arith.constant 0 : index
    %c0_42 = arith.constant 0 : index
    %73 = vector.load %arg7[%c0_41, %c0_42] : memref<8x128xf32, #tpu.memory_space<vmem>>, vector<8x128xf32>
    %74 = arith.truncf %72 : vector<8x128xf32> to vector<8x128xbf16>
    %c0_43 = arith.constant 0 : index
    %c0_44 = arith.constant 0 : index
    %75 = vector.load %arg4[%c0_43, %c0_44] : memref<128x512xbf16, #tpu.memory_space<vmem>>, vector<128x512xbf16>
    %cst = arith.constant dense<0.000000e+00> : vector<8x512xf32>
    %76 = tpu.matmul %74, %75, %cst {dimension_numbers = #tpu.dot_dimension_numbers<[1], [0], [0], [1], [0, 0, 1, 1], [], []>} : vector<8x128xbf16>, vector<128x512xbf16>, vector<8x512xf32> -> vector<8x512xf32>
    %c0_45 = arith.constant 0 : index
    %c0_46 = arith.constant 0 : index
    %77 = vector.load %arg5[%c0_45, %c0_46] : memref<1x512xf32, #tpu.memory_space<vmem>>, vector<1x512xf32>
    %78 = vector.broadcast %77 : vector<1x512xf32> to vector<8x512xf32>
    %79 = arith.addf %76, %78 : vector<8x512xf32>
    %c0_i32_47 = arith.constant 0 : i32
    %c0_i32_48 = arith.constant 0 : i32
    %c0_i32_49 = arith.constant 0 : i32
    %80 = tpu.memref_slice %arg2[%2, %c0_i32_49] : memref<128x128xf32, #tpu.memory_space<any>> -> memref<1x128xf32, #tpu.memory_space<any>>
    %81 = tpu.memref_squeeze %80 : memref<1x128xf32, #tpu.memory_space<any>> -> memref<128xf32, #tpu.memory_space<any>>
    %c0_i32_50 = arith.constant 0 : i32
    %82 = tpu.memref_slice %arg11[%c0_i32_47, %c0_i32_50] : memref<8x128xf32, #tpu.memory_space<vmem>> -> memref<1x128xf32, #tpu.memory_space<vmem>>
    %83 = tpu.memref_squeeze %82 : memref<1x128xf32, #tpu.memory_space<vmem>> -> memref<128xf32, #tpu.memory_space<vmem>>
    %84 = tpu.memref_slice %arg12[%c0_i32_48] : memref<8x!tpu.dma_semaphore, #tpu.memory_space<semaphore_mem>> -> memref<1x!tpu.dma_semaphore, #tpu.memory_space<semaphore_mem>>
    %85 = tpu.memref_squeeze %84 : memref<1x!tpu.dma_semaphore, #tpu.memory_space<semaphore_mem>> -> memref<!tpu.dma_semaphore, #tpu.memory_space<semaphore_mem>>
    tpu.wait_dma2 semaphore(%85 : memref<!tpu.dma_semaphore, #tpu.memory_space<semaphore_mem>>) src(%81 : memref<128xf32, #tpu.memory_space<any>>) dst(%83 : memref<128xf32, #tpu.memory_space<vmem>>)
    %c1_i32_51 = arith.constant 1 : i32
    %c1_i32_52 = arith.constant 1 : i32
    %c0_i32_53 = arith.constant 0 : i32
    %86 = tpu.memref_slice %arg2[%5, %c0_i32_53] : memref<128x128xf32, #tpu.memory_space<any>> -> memref<1x128xf32, #tpu.memory_space<any>>
    %87 = tpu.memref_squeeze %86 : memref<1x128xf32, #tpu.memory_space<any>> -> memref<128xf32, #tpu.memory_space<any>>
    %c0_i32_54 = arith.constant 0 : i32
    %88 = tpu.memref_slice %arg11[%c1_i32_51, %c0_i32_54] : memref<8x128xf32, #tpu.memory_space<vmem>> -> memref<1x128xf32, #tpu.memory_space<vmem>>
    %89 = tpu.memref_squeeze %88 : memref<1x128xf32, #tpu.memory_space<vmem>> -> memref<128xf32, #tpu.memory_space<vmem>>
    %90 = tpu.memref_slice %arg12[%c1_i32_52] : memref<8x!tpu.dma_semaphore, #tpu.memory_space<semaphore_mem>> -> memref<1x!tpu.dma_semaphore, #tpu.memory_space<semaphore_mem>>
    %91 = tpu.memref_squeeze %90 : memref<1x!tpu.dma_semaphore, #tpu.memory_space<semaphore_mem>> -> memref<!tpu.dma_semaphore, #tpu.memory_space<semaphore_mem>>
    tpu.wait_dma2 semaphore(%91 : memref<!tpu.dma_semaphore, #tpu.memory_space<semaphore_mem>>) src(%87 : memref<128xf32, #tpu.memory_space<any>>) dst(%89 : memref<128xf32, #tpu.memory_space<vmem>>)
    %c2_i32_55 = arith.constant 2 : i32
    %c2_i32_56 = arith.constant 2 : i32
    %c0_i32_57 = arith.constant 0 : i32
    %92 = tpu.memref_slice %arg2[%8, %c0_i32_57] : memref<128x128xf32, #tpu.memory_space<any>> -> memref<1x128xf32, #tpu.memory_space<any>>
    %93 = tpu.memref_squeeze %92 : memref<1x128xf32, #tpu.memory_space<any>> -> memref<128xf32, #tpu.memory_space<any>>
    %c0_i32_58 = arith.constant 0 : i32
    %94 = tpu.memref_slice %arg11[%c2_i32_55, %c0_i32_58] : memref<8x128xf32, #tpu.memory_space<vmem>> -> memref<1x128xf32, #tpu.memory_space<vmem>>
    %95 = tpu.memref_squeeze %94 : memref<1x128xf32, #tpu.memory_space<vmem>> -> memref<128xf32, #tpu.memory_space<vmem>>
    %96 = tpu.memref_slice %arg12[%c2_i32_56] : memref<8x!tpu.dma_semaphore, #tpu.memory_space<semaphore_mem>> -> memref<1x!tpu.dma_semaphore, #tpu.memory_space<semaphore_mem>>
    %97 = tpu.memref_squeeze %96 : memref<1x!tpu.dma_semaphore, #tpu.memory_space<semaphore_mem>> -> memref<!tpu.dma_semaphore, #tpu.memory_space<semaphore_mem>>
    tpu.wait_dma2 semaphore(%97 : memref<!tpu.dma_semaphore, #tpu.memory_space<semaphore_mem>>) src(%93 : memref<128xf32, #tpu.memory_space<any>>) dst(%95 : memref<128xf32, #tpu.memory_space<vmem>>)
    %c3_i32_59 = arith.constant 3 : i32
    %c3_i32_60 = arith.constant 3 : i32
    %c0_i32_61 = arith.constant 0 : i32
    %98 = tpu.memref_slice %arg2[%11, %c0_i32_61] : memref<128x128xf32, #tpu.memory_space<any>> -> memref<1x128xf32, #tpu.memory_space<any>>
    %99 = tpu.memref_squeeze %98 : memref<1x128xf32, #tpu.memory_space<any>> -> memref<128xf32, #tpu.memory_space<any>>
    %c0_i32_62 = arith.constant 0 : i32
    %100 = tpu.memref_slice %arg11[%c3_i32_59, %c0_i32_62] : memref<8x128xf32, #tpu.memory_space<vmem>> -> memref<1x128xf32, #tpu.memory_space<vmem>>
    %101 = tpu.memref_squeeze %100 : memref<1x128xf32, #tpu.memory_space<vmem>> -> memref<128xf32, #tpu.memory_space<vmem>>
    %102 = tpu.memref_slice %arg12[%c3_i32_60] : memref<8x!tpu.dma_semaphore, #tpu.memory_space<semaphore_mem>> -> memref<1x!tpu.dma_semaphore, #tpu.memory_space<semaphore_mem>>
    %103 = tpu.memref_squeeze %102 : memref<1x!tpu.dma_semaphore, #tpu.memory_space<semaphore_mem>> -> memref<!tpu.dma_semaphore, #tpu.memory_space<semaphore_mem>>
    tpu.wait_dma2 semaphore(%103 : memref<!tpu.dma_semaphore, #tpu.memory_space<semaphore_mem>>) src(%99 : memref<128xf32, #tpu.memory_space<any>>) dst(%101 : memref<128xf32, #tpu.memory_space<vmem>>)
    %c4_i32_63 = arith.constant 4 : i32
    %c4_i32_64 = arith.constant 4 : i32
    %c0_i32_65 = arith.constant 0 : i32
    %104 = tpu.memref_slice %arg2[%14, %c0_i32_65] : memref<128x128xf32, #tpu.memory_space<any>> -> memref<1x128xf32, #tpu.memory_space<any>>
    %105 = tpu.memref_squeeze %104 : memref<1x128xf32, #tpu.memory_space<any>> -> memref<128xf32, #tpu.memory_space<any>>
    %c0_i32_66 = arith.constant 0 : i32
    %106 = tpu.memref_slice %arg11[%c4_i32_63, %c0_i32_66] : memref<8x128xf32, #tpu.memory_space<vmem>> -> memref<1x128xf32, #tpu.memory_space<vmem>>
    %107 = tpu.memref_squeeze %106 : memref<1x128xf32, #tpu.memory_space<vmem>> -> memref<128xf32, #tpu.memory_space<vmem>>
    %108 = tpu.memref_slice %arg12[%c4_i32_64] : memref<8x!tpu.dma_semaphore, #tpu.memory_space<semaphore_mem>> -> memref<1x!tpu.dma_semaphore, #tpu.memory_space<semaphore_mem>>
    %109 = tpu.memref_squeeze %108 : memref<1x!tpu.dma_semaphore, #tpu.memory_space<semaphore_mem>> -> memref<!tpu.dma_semaphore, #tpu.memory_space<semaphore_mem>>
    tpu.wait_dma2 semaphore(%109 : memref<!tpu.dma_semaphore, #tpu.memory_space<semaphore_mem>>) src(%105 : memref<128xf32, #tpu.memory_space<any>>) dst(%107 : memref<128xf32, #tpu.memory_space<vmem>>)
    %c5_i32_67 = arith.constant 5 : i32
    %c5_i32_68 = arith.constant 5 : i32
    %c0_i32_69 = arith.constant 0 : i32
    %110 = tpu.memref_slice %arg2[%17, %c0_i32_69] : memref<128x128xf32, #tpu.memory_space<any>> -> memref<1x128xf32, #tpu.memory_space<any>>
    %111 = tpu.memref_squeeze %110 : memref<1x128xf32, #tpu.memory_space<any>> -> memref<128xf32, #tpu.memory_space<any>>
    %c0_i32_70 = arith.constant 0 : i32
    %112 = tpu.memref_slice %arg11[%c5_i32_67, %c0_i32_70] : memref<8x128xf32, #tpu.memory_space<vmem>> -> memref<1x128xf32, #tpu.memory_space<vmem>>
    %113 = tpu.memref_squeeze %112 : memref<1x128xf32, #tpu.memory_space<vmem>> -> memref<128xf32, #tpu.memory_space<vmem>>
    %114 = tpu.memref_slice %arg12[%c5_i32_68] : memref<8x!tpu.dma_semaphore, #tpu.memory_space<semaphore_mem>> -> memref<1x!tpu.dma_semaphore, #tpu.memory_space<semaphore_mem>>
    %115 = tpu.memref_squeeze %114 : memref<1x!tpu.dma_semaphore, #tpu.memory_space<semaphore_mem>> -> memref<!tpu.dma_semaphore, #tpu.memory_space<semaphore_mem>>
    tpu.wait_dma2 semaphore(%115 : memref<!tpu.dma_semaphore, #tpu.memory_space<semaphore_mem>>) src(%111 : memref<128xf32, #tpu.memory_space<any>>) dst(%113 : memref<128xf32, #tpu.memory_space<vmem>>)
    %c6_i32_71 = arith.constant 6 : i32
    %c6_i32_72 = arith.constant 6 : i32
    %c0_i32_73 = arith.constant 0 : i32
    %116 = tpu.memref_slice %arg2[%20, %c0_i32_73] : memref<128x128xf32, #tpu.memory_space<any>> -> memref<1x128xf32, #tpu.memory_space<any>>
    %117 = tpu.memref_squeeze %116 : memref<1x128xf32, #tpu.memory_space<any>> -> memref<128xf32, #tpu.memory_space<any>>
    %c0_i32_74 = arith.constant 0 : i32
    %118 = tpu.memref_slice %arg11[%c6_i32_71, %c0_i32_74] : memref<8x128xf32, #tpu.memory_space<vmem>> -> memref<1x128xf32, #tpu.memory_space<vmem>>
    %119 = tpu.memref_squeeze %118 : memref<1x128xf32, #tpu.memory_space<vmem>> -> memref<128xf32, #tpu.memory_space<vmem>>
    %120 = tpu.memref_slice %arg12[%c6_i32_72] : memref<8x!tpu.dma_semaphore, #tpu.memory_space<semaphore_mem>> -> memref<1x!tpu.dma_semaphore, #tpu.memory_space<semaphore_mem>>
    %121 = tpu.memref_squeeze %120 : memref<1x!tpu.dma_semaphore, #tpu.memory_space<semaphore_mem>> -> memref<!tpu.dma_semaphore, #tpu.memory_space<semaphore_mem>>
    tpu.wait_dma2 semaphore(%121 : memref<!tpu.dma_semaphore, #tpu.memory_space<semaphore_mem>>) src(%117 : memref<128xf32, #tpu.memory_space<any>>) dst(%119 : memref<128xf32, #tpu.memory_space<vmem>>)
    %c7_i32_75 = arith.constant 7 : i32
    %c7_i32_76 = arith.constant 7 : i32
    %c0_i32_77 = arith.constant 0 : i32
    %122 = tpu.memref_slice %arg2[%23, %c0_i32_77] : memref<128x128xf32, #tpu.memory_space<any>> -> memref<1x128xf32, #tpu.memory_space<any>>
    %123 = tpu.memref_squeeze %122 : memref<1x128xf32, #tpu.memory_space<any>> -> memref<128xf32, #tpu.memory_space<any>>
    %c0_i32_78 = arith.constant 0 : i32
    %124 = tpu.memref_slice %arg11[%c7_i32_75, %c0_i32_78] : memref<8x128xf32, #tpu.memory_space<vmem>> -> memref<1x128xf32, #tpu.memory_space<vmem>>
    %125 = tpu.memref_squeeze %124 : memref<1x128xf32, #tpu.memory_space<vmem>> -> memref<128xf32, #tpu.memory_space<vmem>>
    %126 = tpu.memref_slice %arg12[%c7_i32_76] : memref<8x!tpu.dma_semaphore, #tpu.memory_space<semaphore_mem>> -> memref<1x!tpu.dma_semaphore, #tpu.memory_space<semaphore_mem>>
    %127 = tpu.memref_squeeze %126 : memref<1x!tpu.dma_semaphore, #tpu.memory_space<semaphore_mem>> -> memref<!tpu.dma_semaphore, #tpu.memory_space<semaphore_mem>>
    tpu.wait_dma2 semaphore(%127 : memref<!tpu.dma_semaphore, #tpu.memory_space<semaphore_mem>>) src(%123 : memref<128xf32, #tpu.memory_space<any>>) dst(%125 : memref<128xf32, #tpu.memory_space<vmem>>)
    %c0_79 = arith.constant 0 : index
    %c0_80 = arith.constant 0 : index
    %128 = vector.load %arg11[%c0_79, %c0_80] : memref<8x128xf32, #tpu.memory_space<vmem>>, vector<8x128xf32>
    %129 = arith.truncf %128 : vector<8x128xf32> to vector<8x128xbf16>
    %c0_81 = arith.constant 0 : index
    %c0_82 = arith.constant 0 : index
    %130 = vector.load %arg3[%c0_81, %c0_82] : memref<128x512xbf16, #tpu.memory_space<vmem>>, vector<128x512xbf16>
    %cst_83 = arith.constant dense<0.000000e+00> : vector<8x512xf32>
    %131 = tpu.matmul %129, %130, %cst_83 {dimension_numbers = #tpu.dot_dimension_numbers<[1], [0], [0], [1], [0, 0, 1, 1], [], []>} : vector<8x128xbf16>, vector<128x512xbf16>, vector<8x512xf32> -> vector<8x512xf32>
    %132 = arith.addf %79, %131 : vector<8x512xf32>
    %133 = vector.extract_strided_slice %132 {offsets = [0, 0], sizes = [8, 128], strides = [1, 1]} : vector<8x512xf32> to vector<8x128xf32>
    %134 = arith.negf %133 : vector<8x128xf32>
    %135 = math.exp %134 : vector<8x128xf32>
    %cst_84 = arith.constant 1.000000e+00 : f32
    %136 = vector.broadcast %cst_84 : f32 to vector<8x128xf32>
    %137 = arith.addf %136, %135 : vector<8x128xf32>
    %138 = arith.divf %136, %137 : vector<8x128xf32>
    %139 = vector.extract_strided_slice %132 {offsets = [0, 128], sizes = [8, 128], strides = [1, 1]} : vector<8x512xf32> to vector<8x128xf32>
    %140 = arith.negf %139 : vector<8x128xf32>
    %141 = math.exp %140 : vector<8x128xf32>
    %cst_85 = arith.constant 1.000000e+00 : f32
    %142 = vector.broadcast %cst_85 : f32 to vector<8x128xf32>
    %143 = arith.addf %142, %141 : vector<8x128xf32>
    %144 = arith.divf %142, %143 : vector<8x128xf32>
    %145 = vector.extract_strided_slice %132 {offsets = [0, 256], sizes = [8, 128], strides = [1, 1]} : vector<8x512xf32> to vector<8x128xf32>
    %146 = math.tanh %145 : vector<8x128xf32>
    %147 = vector.extract_strided_slice %132 {offsets = [0, 384], sizes = [8, 128], strides = [1, 1]} : vector<8x512xf32> to vector<8x128xf32>
    %148 = arith.negf %147 : vector<8x128xf32>
    %149 = math.exp %148 : vector<8x128xf32>
    %cst_86 = arith.constant 1.000000e+00 : f32
    %150 = vector.broadcast %cst_86 : f32 to vector<8x128xf32>
    %151 = arith.addf %150, %149 : vector<8x128xf32>
    %152 = arith.divf %150, %151 : vector<8x128xf32>
    %153 = arith.mulf %144, %73 : vector<8x128xf32>
    %154 = arith.mulf %138, %146 : vector<8x128xf32>
    %155 = arith.addf %153, %154 : vector<8x128xf32>
    %156 = math.tanh %155 : vector<8x128xf32>
    %157 = arith.mulf %152, %156 : vector<8x128xf32>
    %c0_87 = arith.constant 0 : index
    %c0_88 = arith.constant 0 : index
    %158 = vector.load %arg8[%c0_87, %c0_88] : memref<8x128xf32, #tpu.memory_space<vmem>>, vector<8x128xf32>
    tpu.vector_store %arg8[%c0_87, %c0_88], %157 {strides = array<i32>} : memref<8x128xf32, #tpu.memory_space<vmem>>, vector<8x128xf32>,
    %c0_89 = arith.constant 0 : index
    %c0_90 = arith.constant 0 : index
    %159 = vector.load %arg9[%c0_89, %c0_90] : memref<8x128xf32, #tpu.memory_space<vmem>>, vector<8x128xf32>
    tpu.vector_store %arg9[%c0_89, %c0_90], %155 {strides = array<i32>} : memref<8x128xf32, #tpu.memory_space<vmem>>, vector<8x128xf32>,
    %160 = arith.truncf %157 : vector<8x128xf32> to vector<8x128xbf16>
    %c0_91 = arith.constant 0 : index
    %c0_92 = arith.constant 0 : index
    %161 = vector.load %arg10[%c0_91, %c0_92] : memref<8x128xbf16, #tpu.memory_space<vmem>>, vector<8x128xbf16>
    tpu.vector_store %arg10[%c0_91, %c0_92], %160 {strides = array<i32>} : memref<8x128xbf16, #tpu.memory_space<vmem>>, vector<8x128xbf16>,
    return
  }
  func.func @transform_1(%arg0: i32, %arg1: memref<8xi32, #tpu.memory_space<smem>>) -> (i32, i32) {
    %c0_i32 = arith.constant 0 : i32
    %c0_i32_0 = arith.constant 0 : i32
    %c0_i32_1 = arith.constant 0 : i32
    return %c0_i32, %c0_i32_0 : i32, i32
  }
  func.func @transform_2(%arg0: i32, %arg1: memref<8xi32, #tpu.memory_space<smem>>) -> (i32, i32) {
    %c0_i32 = arith.constant 0 : i32
    %c0_i32_0 = arith.constant 0 : i32
    %c0_i32_1 = arith.constant 0 : i32
    return %c0_i32, %c0_i32_0 : i32, i32
  }
  func.func @transform_3(%arg0: i32, %arg1: memref<8xi32, #tpu.memory_space<smem>>) -> (i32, i32) {
    %c0_i32 = arith.constant 0 : i32
    %c0_i32_0 = arith.constant 0 : i32
    %c0_i32_1 = arith.constant 0 : i32
    return %c0_i32, %c0_i32_0 : i32, i32
  }
  func.func @transform_4(%arg0: i32, %arg1: memref<8xi32, #tpu.memory_space<smem>>) -> (i32, i32) {
    %c0_i32 = arith.constant 0 : i32
    %c0_i32_0 = arith.constant 0 : i32
    %c0_i32_1 = arith.constant 0 : i32
    return %c0_i32, %c0_i32_0 : i32, i32
  }
  func.func @transform_5(%arg0: i32, %arg1: memref<8xi32, #tpu.memory_space<smem>>) -> (i32, i32) {
    %c0_i32 = arith.constant 0 : i32
    %c0_i32_0 = arith.constant 0 : i32
    %c0_i32_1 = arith.constant 0 : i32
    return %c0_i32, %c0_i32_0 : i32, i32
  }
  func.func @transform_6(%arg0: i32, %arg1: memref<8xi32, #tpu.memory_space<smem>>) -> (i32, i32) {
    %c0_i32 = arith.constant 0 : i32
    %c0_i32_0 = arith.constant 0 : i32
    %c0_i32_1 = arith.constant 0 : i32
    return %c0_i32, %c0_i32_0 : i32, i32
  }
  func.func @transform_7(%arg0: i32, %arg1: memref<8xi32, #tpu.memory_space<smem>>) -> (i32, i32) {
    %c0_i32 = arith.constant 0 : i32
    %c0_i32_0 = arith.constant 0 : i32
    %c0_i32_1 = arith.constant 0 : i32
    return %c0_i32, %c0_i32_0 : i32, i32
  }
  func.func @transform_8(%arg0: i32, %arg1: memref<8xi32, #tpu.memory_space<smem>>) -> (i32, i32) {
    %c0_i32 = arith.constant 0 : i32
    %c0_i32_0 = arith.constant 0 : i32
    %c0_i32_1 = arith.constant 0 : i32
    return %c0_i32, %c0_i32_0 : i32, i32
  }
}

module attributes {stable_mosaic.version = 11 : i64} {
  func.func @_proj_kernel(%arg0: i32, %arg1: memref<8x128xbf16, #tpu.memory_space<vmem>>, %arg2: memref<128x128xbf16, #tpu.memory_space<vmem>>, %arg3: memref<1x128xf32, #tpu.memory_space<vmem>>, %arg4: memref<8x128xf32, #tpu.memory_space<vmem>>) attributes {dimension_semantics = [#tpu.dimension_semantics<parallel>], iteration_bounds = array<i64: 1>, scalar_prefetch = 0 : i64, scratch_operands = 0 : i64, tpu.core_type = #tpu.core_type<tc>, window_params = [{pipeline_mode = #tpu.pipeline_mode<synchronous>, transform_indices = @transform_0, window_bounds = array<i64: 8, 128>}, {transform_indices = @transform_1, window_bounds = array<i64: 128, 128>}, {transform_indices = @transform_2, window_bounds = array<i64: 1, 128>}, {transform_indices = @transform_3, window_bounds = array<i64: 8, 128>}]} {
    %c0 = arith.constant 0 : index
    %c0_0 = arith.constant 0 : index
    %0 = vector.load %arg1[%c0, %c0_0] : memref<8x128xbf16, #tpu.memory_space<vmem>>, vector<8x128xbf16>
    %c0_1 = arith.constant 0 : index
    %c0_2 = arith.constant 0 : index
    %1 = vector.load %arg2[%c0_1, %c0_2] : memref<128x128xbf16, #tpu.memory_space<vmem>>, vector<128x128xbf16>
    %cst = arith.constant dense<0.000000e+00> : vector<8x128xf32>
    %2 = tpu.matmul %0, %1, %cst {dimension_numbers = #tpu.dot_dimension_numbers<[1], [0], [0], [1], [0, 0, 1, 1], [], []>} : vector<8x128xbf16>, vector<128x128xbf16>, vector<8x128xf32> -> vector<8x128xf32>
    %c0_3 = arith.constant 0 : index
    %c0_4 = arith.constant 0 : index
    %3 = vector.load %arg3[%c0_3, %c0_4] : memref<1x128xf32, #tpu.memory_space<vmem>>, vector<1x128xf32>
    %4 = vector.broadcast %3 : vector<1x128xf32> to vector<8x128xf32>
    %5 = arith.addf %2, %4 : vector<8x128xf32>
    %c0_5 = arith.constant 0 : index
    %c0_6 = arith.constant 0 : index
    %6 = vector.load %arg4[%c0_5, %c0_6] : memref<8x128xf32, #tpu.memory_space<vmem>>, vector<8x128xf32>
    tpu.vector_store %arg4[%c0_5, %c0_6], %5 {strides = array<i32>} : memref<8x128xf32, #tpu.memory_space<vmem>>, vector<8x128xf32>,
    return
  }
  func.func @transform_0(%arg0: i32) -> (i32, i32) {
    %c0_i32 = arith.constant 0 : i32
    %c0_i32_0 = arith.constant 0 : i32
    %c0_i32_1 = arith.constant 0 : i32
    return %c0_i32, %c0_i32_0 : i32, i32
  }
  func.func @transform_1(%arg0: i32) -> (i32, i32) {
    %c0_i32 = arith.constant 0 : i32
    %c0_i32_0 = arith.constant 0 : i32
    return %c0_i32, %arg0 : i32, i32
  }
  func.func @transform_2(%arg0: i32) -> (i32, i32) {
    %c0_i32 = arith.constant 0 : i32
    %c0_i32_0 = arith.constant 0 : i32
    return %c0_i32, %arg0 : i32, i32
  }
  func.func @transform_3(%arg0: i32) -> (i32, i32) {
    %c0_i32 = arith.constant 0 : i32
    %c0_i32_0 = arith.constant 0 : i32
    return %c0_i32, %arg0 : i32, i32
  }
}

</mosaic_0001>

<llo_original>
// kernel: decoder_forward.3
$region0: #{decoder_forward.3}
  #allocation0 [shape = 'u32[]', space=smem, size = 0x4, offset = 0x4, fixed_abs, tag = 'smem constant byte address 0x4 - core index']
  #allocation1 [shape = 'u32[144,128]{1,0:T(1,128)}', space=vmem, size = 0x12000, scoped, tag = 'internal scratch']
  %s0 = inlined_call_operand.vmem [shape: bf16[8,128], index: 0, kind: input, shape index: {}]
  %s1 = inlined_call_operand.vmem [shape: bf16[128,128], index: 1, kind: input, shape index: {}]
  %s2 = inlined_call_operand.vmem [shape: f32[1,128], index: 2, kind: input, shape index: {}]
  %s3 = inlined_call_operand.vmem [shape: f32[8,128], index: 3, kind: output, shape index: {}]
  %s4 = sld [smem:[#allocation0]]
  $region22: #{decoder_forward.3} parent=0
    _
  %s6 = ssub.s32 1, %s4
  %s7 = scalar_select 0, %s6, %s4
  // Predicated region
  $region2: #{decoder_forward.3} parent=0 // pred_check
    _
  $region3: #{decoder_forward.3} parent=0 // pred_check_branch
    %9 = sbr.rel (0) target = $region5
  $region4: #{decoder_forward.3} parent=0 // pred_region
    _
  $region5: #{decoder_forward.3} parent=0 // pred_fallthru
    _
  // Predicated region
  $region6: #{decoder_forward.3} parent=0 // pred_check
    _
  $region7: #{decoder_forward.3} parent=0 // pred_check_branch
    %11 = sbr.rel (0) target = $region9
  $region8: #{decoder_forward.3} parent=0 // pred_region
    _
  $region9: #{decoder_forward.3} parent=0 // pred_fallthru
    _
  // Predicated region
  $region10: #{decoder_forward.3} parent=0 // pred_check
    _
  $region11: #{decoder_forward.3} parent=0 // pred_check_branch
    %13 = sbr.rel (0) target = $region13
  $region12: #{decoder_forward.3} parent=0 // pred_region
    _
  $region13: #{decoder_forward.3} parent=0 // pred_fallthru
    _
  %v15 = vld [vmem:[%s0] sm:$0xf]
  %v16 = vld [vmem:[%s1] sm:$0xf]
  %v17 = vld [vmem:[%s1 + $0x4] sm:$0xf]
  %v18 = vld [vmem:[%s1 + $0x8] sm:$0xf]
  %v19 = vld [vmem:[%s1 + $0xc] sm:$0xf]
  %v20 = vld [vmem:[%s1 + $0x10] sm:$0xf]
  %v21 = vld [vmem:[%s1 + $0x14] sm:$0xf]
  %v22 = vld [vmem:[%s1 + $0x18] sm:$0xf]
  %v23 = vld [vmem:[%s1 + $0x1c] sm:$0xf]
  %v24 = vld [vmem:[%s1 + $0x20] sm:$0xf]
  %v25 = vld [vmem:[%s1 + $0x24] sm:$0xf]
  %v26 = vld [vmem:[%s1 + $0x28] sm:$0xf]
  %v27 = vld [vmem:[%s1 + $0x2c] sm:$0xf]
  %v28 = vld [vmem:[%s1 + $0x30] sm:$0xf]
  %v29 = vld [vmem:[%s1 + $0x34] sm:$0xf]
  %v30 = vld [vmem:[%s1 + $0x38] sm:$0xf]
  %v31 = vld [vmem:[%s1 + $0x3c] sm:$0xf]
  %v32 = vld [vmem:[%s2] sm:$0x1]
  %v34 = vlaneseq
  %v35 = vshrl.u32 %v34, 7
  %v36 = vsub.s32 0, %v35
  %v37 = vrot.slane %v32, %v36
  %v55 = vunpack.c.l.b16 %v16
  %v56 = vunpack.c.l.b16 %v17
  %v57 = vunpack.c.l.b16 %v18
  %v58 = vunpack.c.l.b16 %v19
  %v59 = vunpack.c.l.b16 %v20
  %v60 = vunpack.c.l.b16 %v21
  %v61 = vunpack.c.l.b16 %v22
  %v62 = vunpack.c.l.b16 %v23
  %v63 = vunpack.c.l.b16 %v24
  %v64 = vunpack.c.l.b16 %v25
  %v65 = vunpack.c.l.b16 %v26
  %v66 = vunpack.c.l.b16 %v27
  %v67 = vunpack.c.l.b16 %v28
  %v68 = vunpack.c.l.b16 %v29
  %v69 = vunpack.c.l.b16 %v30
  %v70 = vunpack.c.l.b16 %v31
  %v71 = vpack.c.b16 %v56, %v55
  %v72 = vpack.c.b16 %v58, %v57
  %v73 = vpack.c.b16 %v60, %v59
  %v74 = vpack.c.b16 %v62, %v61
  %v75 = vpack.c.b16 %v64, %v63
  %v76 = vpack.c.b16 %v66, %v65
  %v77 = vpack.c.b16 %v68, %v67
  %v78 = vpack.c.b16 %v70, %v69
  %87 = vmatprep.subr.bf16.mxu0 0
  %88 = vmatpush1.bf16.msra.mxu0 %v78
  %89 = vmatprep.subr.bf16.mxu0 0
  %90 = vmatpush1.bf16.msra.mxu0 %v77
  %91 = vmatprep.subr.bf16.mxu0 0
  %92 = vmatpush1.bf16.msra.mxu0 %v76
  %93 = vmatprep.subr.bf16.mxu0 0
  %94 = vmatpush1.bf16.msra.mxu0 %v75
  %95 = vmatprep.subr.bf16.mxu0 0
  %96 = vmatpush1.bf16.msra.mxu0 %v74
  %97 = vmatprep.subr.bf16.mxu0 0
  %98 = vmatpush1.bf16.msra.mxu0 %v73
  %99 = vmatprep.subr.bf16.mxu0 0
  %100 = vmatpush1.bf16.msra.mxu0 %v72
  %101 = vmatprep.subr.bf16.mxu0 0
  %102 = vmatpush1.bf16.msra.mxu0 %v71
  %103 = vmatprep.subr.bf16.mxu0 0
  %104 = vmatpush2.bf16.msra.mxu0 0
  %105 = vmatprep.subr.bf16.mxu0 0
  %106 = vmatpush2.bf16.msra.mxu0 0
  %107 = vmatprep.subr.bf16.mxu0 0
  %108 = vmatpush2.bf16.msra.mxu0 0
  %109 = vmatprep.subr.bf16.mxu0 0
  %110 = vmatpush2.bf16.msra.mxu0 0
  %111 = vmatprep.subr.bf16.mxu0 0
  %112 = vmatpush2.bf16.msra.mxu0 0
  %113 = vmatprep.subr.bf16.mxu0 0
  %114 = vmatpush2.bf16.msra.mxu0 0
  %115 = vmatprep.subr.bf16.mxu0 0
  %116 = vmatpush2.bf16.msra.mxu0 0
  %117 = vmatprep.subr.bf16.mxu0 0
  %118 = vmatpush2.bf16.msra.mxu0 0
  %119 = vmatprep.mubr.bf16.mxu0 0
  %120 = vmatmul.mubr.bf16.gmra.mxu0 %v15
  %v121 = vpop.f32.mrf.mxu0
  %v122 = vadd.f32 %v37, %v121
  %v123 = vpop.f32.mrf.mxu0
  %v124 = vpop.f32.mrf.mxu0
  %v125 = vpop.f32.mrf.mxu0
  %126 = vdwg.mxu0
  %127 = vst [vmem:[%s3] sm:$0xff] %v122
  // Predicated region
  $region14: #{decoder_forward.3} parent=0 // pred_check
    _
  $region15: #{decoder_forward.3} parent=0 // pred_check_branch
    %129 = sbr.rel (0) target = $region17
  $region16: #{decoder_forward.3} parent=0 // pred_region
    _
  $region17: #{decoder_forward.3} parent=0 // pred_fallthru
    _
  // Predicated region
  $region18: #{decoder_forward.3} parent=0 // pred_check
    _
  $region19: #{decoder_forward.3} parent=0 // pred_check_branch
    %131 = sbr.rel (0) target = $region21
  $region20: #{decoder_forward.3} parent=0 // pred_region
    _
  $region21: #{decoder_forward.3} parent=0 // pred_fallthru
    _

// kernel: decoder_forward.2
$region0: #{decoder_forward.2}
  #allocation0 [shape = 'u32[]', space=smem, size = 0x4, offset = 0x4, fixed_abs, tag = 'smem constant byte address 0x4 - core index']
  #allocation1 [shape = 'u32[144,128]{1,0:T(1,128)}', space=vmem, size = 0x12000, scoped, tag = 'internal scratch']
  #allocation2 [shape = 'f32[8,128]{1,0:T(8,128)}', space=vmem, size = 0x1000, scoped, tag = 'scratch operand']
  #allocation3 [shape = 's32[8]{0}', space=sflag, size = 0x20, scoped, tag = 'scratch operand']
  #allocation4 [shape = 's32[1]{0}', space=sflag, size = 0x4, scoped, tag = 'scoped memory for decoder_forward.2']
  #allocation5 [shape = 'u8[512]{0}', space=smem, size = 0x200, scoped, tag = 'prefetched SMEM operand 0']
  #allocation10 [shape = 's32[]', space=sflag, size = 0x4, offset = 0, fixed_abs, tag = 'sflag constant byte address 0x0 - dummy sync flag']
  #allocation11 [shape = 's32[]', space=sflag, size = 0x4, offset = 0, fixed_abs, tag = 'sflag constant byte address 0x0 - dummy sync flag']
  #allocation12 [shape = 'u32[]', space=smem, size = 0x4, offset = 0x44, fixed_abs, tag = 'smem constant byte address 0x44 - assertion arg 0']
  #allocation13 [shape = 'u32[]', space=smem, size = 0x4, offset = 0x48, fixed_abs, tag = 'smem constant byte address 0x48 - assertion arg 1']
  #allocation14 [shape = 's32[]', space=sflag, size = 0x4, offset = 0, fixed_abs, tag = 'sflag constant byte address 0x0 - dummy sync flag']
  #allocation15 [shape = 's32[]', space=sflag, size = 0x4, offset = 0, fixed_abs, tag = 'sflag constant byte address 0x0 - dummy sync flag']
  #allocation16 [shape = 's32[]', space=sflag, size = 0x4, offset = 0, fixed_abs, tag = 'sflag constant byte address 0x0 - dummy sync flag']
  #allocation17 [shape = 's32[]', space=sflag, size = 0x4, offset = 0, fixed_abs, tag = 'sflag constant byte address 0x0 - dummy sync flag']
  #allocation18 [shape = 's32[]', space=sflag, size = 0x4, offset = 0, fixed_abs, tag = 'sflag constant byte address 0x0 - dummy sync flag']
  #allocation19 [shape = 's32[]', space=sflag, size = 0x4, offset = 0, fixed_abs, tag = 'sflag constant byte address 0x0 - dummy sync flag']
  #allocation20 [shape = 's32[]', space=sflag, size = 0x4, offset = 0, fixed_abs, tag = 'sflag constant byte address 0x0 - dummy sync flag']
  #allocation21 [shape = 's32[]', space=sflag, size = 0x4, offset = 0, fixed_abs, tag = 'sflag constant byte address 0x0 - dummy sync flag']
  #allocation22 [shape = 's32[]', space=sflag, size = 0x4, offset = 0, fixed_abs, tag = 'sflag constant byte address 0x0 - dummy sync flag']
  #allocation23 [shape = 's32[]', space=sflag, size = 0x4, offset = 0, fixed_abs, tag = 'sflag constant byte address 0x0 - dummy sync flag']
  #allocation24 [shape = 's32[]', space=sflag, size = 0x4, offset = 0, fixed_abs, tag = 'sflag constant byte address 0x0 - dummy sync flag']
  #allocation25 [shape = 's32[]', space=sflag, size = 0x4, offset = 0, fixed_abs, tag = 'sflag constant byte address 0x0 - dummy sync flag']
  #allocation26 [shape = 's32[]', space=sflag, size = 0x4, offset = 0, fixed_abs, tag = 'sflag constant byte address 0x0 - dummy sync flag']
  #allocation27 [shape = 's32[]', space=sflag, size = 0x4, offset = 0, fixed_abs, tag = 'sflag constant byte address 0x0 - dummy sync flag']
  %s0 = inlined_call_operand.vmem [shape: s32[8], index: 0, kind: input, shape index: {}]
  %s1 = inlined_call_operand.hbm [shape: f32[128,128], index: 1, kind: input, shape index: {}]
  %s2 = inlined_call_operand.hbm [shape: bf16[128,512], index: 2, kind: input, shape index: {}]
  %s3 = inlined_call_operand.hbm [shape: bf16[128,512], index: 3, kind: input, shape index: {}]
  %s4 = inlined_call_operand.vmem [shape: f32[1,512], index: 4, kind: input, shape index: {}]
  %s5 = inlined_call_operand.vmem [shape: f32[8,128], index: 5, kind: input, shape index: {}, may-alias: {5,7}]
  %s6 = inlined_call_operand.vmem [shape: f32[8,128], index: 6, kind: input, shape index: {}, may-alias: {6,8}]
  %s7 = inlined_call_operand.vmem [shape: f32[8,128], index: 7, kind: output, shape index: {0}, may-alias: {5,7}]
  %s8 = inlined_call_operand.vmem [shape: f32[8,128], index: 8, kind: output, shape index: {1}, may-alias: {6,8}]
  %s9 = inlined_call_operand.vmem [shape: bf16[8,128], index: 9, kind: output, shape index: {2}]
  %10 = xla_tuple %s7, %s8, %s9
  %s11 = sld [smem:[#allocation0]]
  $region86: #{decoder_forward.2} parent=0
    _
  %s13 = ssub.s32 1, %s11
  %s14 = scalar_select 0, %s13, %s11
  %s15 = sshll.u32 %s0, 4
  %s16 = int_to_ptr.vmem [resolvable:$true] %s15
  %18 = dma.vmem_to_smem %s16, 16, [#allocation5], [#allocation4]
  %19 = dma.done [#allocation4], 16
  %20 = sfence
  $region1: #{decoder_forward.2} parent=0
    #allocation6 [shape = 'u8[131072]{0}', space=vmem, size = 0x20000, scoped, tag = 'input window, operand 2, single buffered']
    #allocation7 [shape = 's32[1]{0}', space=sflag, size = 0x4, scoped, tag = 'scoped memory for decoder_forward.2']
    #allocation8 [shape = 'u8[131072]{0}', space=vmem, size = 0x20000, scoped, tag = 'input window, operand 3, single buffered']
    #allocation9 [shape = 's32[1]{0}', space=sflag, size = 0x4, scoped, tag = 'scoped memory for decoder_forward.2']
    %21 = vsyncpa [#allocation7], 0
    %22 = vsyncpa [#allocation9], 0
    // Predicated region
    $region2: #{decoder_forward.2} parent=1 // pred_check
      _
    $region3: #{decoder_forward.2} parent=1 // pred_check_branch
      %24 = sbr.rel (0) target = $region5
    $region4: #{decoder_forward.2} parent=1 // pred_region
      %s26 = ssub.s32 4096, 4096
      %27 = vsyncadd [#allocation7], %s26
      %s28 = sshll.u32 [#allocation6], 4
      %s29 = int_to_ptr.vmem [resolvable:$true] %s28
      %34 = dma.hbm_to_vmem [thread:$0]  %s2, 4096, %s29, [#allocation7], 256, 256, 16
    $region5: #{decoder_forward.2} parent=1 // pred_fallthru
      _
    // Predicated region
    $region6: #{decoder_forward.2} parent=1 // pred_check
      _
    $region7: #{decoder_forward.2} parent=1 // pred_check_branch
      %36 = sbr.rel (0) target = $region9
    $region8: #{decoder_forward.2} parent=1 // pred_region
      %s38 = ssub.s32 4096, 4096
      %39 = vsyncadd [#allocation9], %s38
      %s40 = sshll.u32 [#allocation8], 4
      %s41 = int_to_ptr.vmem [resolvable:$true] %s40
      %46 = dma.hbm_to_vmem [thread:$0]  %s3, 4096, %s41, [#allocation9], 256, 256, 16
    $region9: #{decoder_forward.2} parent=1 // pred_fallthru
      _
    // Predicated region
    $region10: #{decoder_forward.2} parent=1 // pred_check
      _
    $region11: #{decoder_forward.2} parent=1 // pred_check_branch
      %48 = sbr.rel (0) target = $region13
    $region12: #{decoder_forward.2} parent=1 // pred_region
      _
    $region13: #{decoder_forward.2} parent=1 // pred_fallthru
      _
    // Predicated region
    $region14: #{decoder_forward.2} parent=1 // pred_check
      _
    $region15: #{decoder_forward.2} parent=1 // pred_check_branch
      %50 = sbr.rel (0) target = $region17
    $region16: #{decoder_forward.2} parent=1 // pred_region
      _
    $region17: #{decoder_forward.2} parent=1 // pred_fallthru
      _
    // Predicated region
    $region18: #{decoder_forward.2} parent=1 // pred_check
      _
    $region19: #{decoder_forward.2} parent=1 // pred_check_branch
      %52 = sbr.rel (0) target = $region21
    $region20: #{decoder_forward.2} parent=1 // pred_region
      _
    $region21: #{decoder_forward.2} parent=1 // pred_fallthru
      _
    // Predicated region
    $region22: #{decoder_forward.2} parent=1 // pred_check
      _
    $region23: #{decoder_forward.2} parent=1 // pred_check_branch
      %54 = sbr.rel (0) target = $region25
    $region24: #{decoder_forward.2} parent=1 // pred_region
      %55 = dma.done [#allocation7], 4096
    $region25: #{decoder_forward.2} parent=1 // pred_fallthru
      _
    // Predicated region
    $region26: #{decoder_forward.2} parent=1 // pred_check
      _
    $region27: #{decoder_forward.2} parent=1 // pred_check_branch
      %57 = sbr.rel (0) target = $region29
    $region28: #{decoder_forward.2} parent=1 // pred_region
      %58 = dma.done [#allocation9], 4096
    $region29: #{decoder_forward.2} parent=1 // pred_fallthru
      _
    %s60 = sld [smem:[#allocation5]]
    %p61 = scmp.gt.s32.totalorder %s60, 0
    %s62 = scalar_select %p61, %s60, 0
    %p63 = scmp.lt.s32.totalorder %s62, 127
    %s64 = scalar_select %p63, %s62, 127
    %s65 = sld [smem:[#allocation5 + $0x1]]
    %p66 = scmp.gt.s32.totalorder %s65, 0
    %s67 = scalar_select %p66, %s65, 0
    %p68 = scmp.lt.s32.totalorder %s67, 127
    %s69 = scalar_select %p68, %s67, 127
    %s70 = sld [smem:[#allocation5 + $0x2]]
    %p71 = scmp.gt.s32.totalorder %s70, 0
    %s72 = scalar_select %p71, %s70, 0
    %p73 = scmp.lt.s32.totalorder %s72, 127
    %s74 = scalar_select %p73, %s72, 127
    %s75 = sld [smem:[#allocation5 + $0x3]]
    %p76 = scmp.gt.s32.totalorder %s75, 0
    %s77 = scalar_select %p76, %s75, 0
    %p78 = scmp.lt.s32.totalorder %s77, 127
    %s79 = scalar_select %p78, %s77, 127
    %s80 = sld [smem:[#allocation5 + $0x4]]
    %p81 = scmp.gt.s32.totalorder %s80, 0
    %s82 = scalar_select %p81, %s80, 0
    %p83 = scmp.lt.s32.totalorder %s82, 127
    %s84 = scalar_select %p83, %s82, 127
    %s85 = sld [smem:[#allocation5 + $0x5]]
    %p86 = scmp.gt.s32.totalorder %s85, 0
    %s87 = scalar_select %p86, %s85, 0
    %p88 = scmp.lt.s32.totalorder %s87, 127
    %s89 = scalar_select %p88, %s87, 127
    %s90 = sld [smem:[#allocation5 + $0x6]]
    %p91 = scmp.gt.s32.totalorder %s90, 0
    %s92 = scalar_select %p91, %s90, 0
    %p93 = scmp.lt.s32.totalorder %s92, 127
    %s94 = scalar_select %p93, %s92, 127
    %s95 = sld [smem:[#allocation5 + $0x7]]
    %p96 = scmp.gt.s32.totalorder %s95, 0
    %s97 = scalar_select %p96, %s95, 0
    %p98 = scmp.lt.s32.totalorder %s97, 127
    %s99 = scalar_select %p98, %s97, 127
    %s100 = smul.addr %s64, 16
    %s101 = scalar_lea.hbm %s1, %s100
    // Predicated region
    $region30: #{decoder_forward.2} parent=1 // pred_check
      _
    $region31: #{decoder_forward.2} parent=1 // pred_check_branch
      %103 = sbr.rel target = $region33
    $region32: #{decoder_forward.2} parent=1 // pred_region
      %104 = sst [smem:[#allocation12]] [#allocation11]
      %105 = sst [smem:[#allocation13]] [#allocation10]
    $region33: #{decoder_forward.2} parent=1 // pred_fallthru
      _
    %107 = shalt.err (0)
    %s109 = sshll.u32 [#allocation2], 4
    %s110 = int_to_ptr.vmem [resolvable:$true] %s109
    %112 = dma.hbm_to_vmem [thread:$0]  %s101, 16, %s110, [#allocation3]
    %s113 = smul.addr %s69, 16
    %s114 = scalar_lea.hbm %s1, %s113
    %s115 = scalar_lea.vmem [#allocation2], 1
    %s116 = scalar_lea.sflag [#allocation3], 1
    // Predicated region
    $region34: #{decoder_forward.2} parent=1 // pred_check
      _
    $region35: #{decoder_forward.2} parent=1 // pred_check_branch
      %118 = sbr.rel target = $region37
    $region36: #{decoder_forward.2} parent=1 // pred_region
      %119 = sst [smem:[#allocation12]] [#allocation15]
      %120 = sst [smem:[#allocation13]] [#allocation14]
    $region37: #{decoder_forward.2} parent=1 // pred_fallthru
      _
    %122 = shalt.err (0)
    %s124 = sshll.u32 %s115, 4
    %s125 = int_to_ptr.vmem [resolvable:$true] %s124
    %127 = dma.hbm_to_vmem [thread:$0]  %s114, 16, %s125, %s116
    %s128 = smul.addr %s74, 16
    %s129 = scalar_lea.hbm %s1, %s128
    %s130 = scalar_lea.vmem [#allocation2], 2
    %s131 = scalar_lea.sflag [#allocation3], 2
    // Predicated region
    $region38: #{decoder_forward.2} parent=1 // pred_check
      _
    $region39: #{decoder_forward.2} parent=1 // pred_check_branch
      %133 = sbr.rel target = $region41
    $region40: #{decoder_forward.2} parent=1 // pred_region
      %134 = sst [smem:[#allocation12]] [#allocation17]
      %135 = sst [smem:[#allocation13]] [#allocation16]
    $region41: #{decoder_forward.2} parent=1 // pred_fallthru
      _
    %137 = shalt.err (0)
    %s139 = sshll.u32 %s130, 4
    %s140 = int_to_ptr.vmem [resolvable:$true] %s139
    %142 = dma.hbm_to_vmem [thread:$0]  %s129, 16, %s140, %s131
    %s143 = smul.addr %s79, 16
    %s144 = scalar_lea.hbm %s1, %s143
    %s145 = scalar_lea.vmem [#allocation2], 3
    %s146 = scalar_lea.sflag [#allocation3], 3
    // Predicated region
    $region42: #{decoder_forward.2} parent=1 // pred_check
      _
    $region43: #{decoder_forward.2} parent=1 // pred_check_branch
      %148 = sbr.rel target = $region45
    $region44: #{decoder_forward.2} parent=1 // pred_region
      %149 = sst [smem:[#allocation12]] [#allocation19]
      %150 = sst [smem:[#allocation13]] [#allocation18]
    $region45: #{decoder_forward.2} parent=1 // pred_fallthru
      _
    %152 = shalt.err (0)
    %s154 = sshll.u32 %s145, 4
    %s155 = int_to_ptr.vmem [resolvable:$true] %s154
    %157 = dma.hbm_to_vmem [thread:$0]  %s144, 16, %s155, %s146
    %s158 = smul.addr %s84, 16
    %s159 = scalar_lea.hbm %s1, %s158
    %s160 = scalar_lea.vmem [#allocation2], 4
    %s161 = scalar_lea.sflag [#allocation3], 4
    // Predicated region
    $region46: #{decoder_forward.2} parent=1 // pred_check
      _
    $region47: #{decoder_forward.2} parent=1 // pred_check_branch
      %163 = sbr.rel target = $region49
    $region48: #{decoder_forward.2} parent=1 // pred_region
      %164 = sst [smem:[#allocation12]] [#allocation21]
      %165 = sst [smem:[#allocation13]] [#allocation20]
    $region49: #{decoder_forward.2} parent=1 // pred_fallthru
      _
    %167 = shalt.err (0)
    %s169 = sshll.u32 %s160, 4
    %s170 = int_to_ptr.vmem [resolvable:$true] %s169
    %172 = dma.hbm_to_vmem [thread:$0]  %s159, 16, %s170, %s161
    %s173 = smul.addr %s89, 16
    %s174 = scalar_lea.hbm %s1, %s173
    %s175 = scalar_lea.vmem [#allocation2], 5
    %s176 = scalar_lea.sflag [#allocation3], 5
    // Predicated region
    $region50: #{decoder_forward.2} parent=1 // pred_check
      _
    $region51: #{decoder_forward.2} parent=1 // pred_check_branch
      %178 = sbr.rel target = $region53
    $region52: #{decoder_forward.2} parent=1 // pred_region
      %179 = sst [smem:[#allocation12]] [#allocation23]
      %180 = sst [smem:[#allocation13]] [#allocation22]
    $region53: #{decoder_forward.2} parent=1 // pred_fallthru
      _
    %182 = shalt.err (0)
    %s184 = sshll.u32 %s175, 4
    %s185 = int_to_ptr.vmem [resolvable:$true] %s184
    %187 = dma.hbm_to_vmem [thread:$0]  %s174, 16, %s185, %s176
    %s188 = smul.addr %s94, 16
    %s189 = scalar_lea.hbm %s1, %s188
    %s190 = scalar_lea.vmem [#allocation2], 6
    %s191 = scalar_lea.sflag [#allocation3], 6
    // Predicated region
    $region54: #{decoder_forward.2} parent=1 // pred_check
      _
    $region55: #{decoder_forward.2} parent=1 // pred_check_branch
      %193 = sbr.rel target = $region57
    $region56: #{decoder_forward.2} parent=1 // pred_region
      %194 = sst [smem:[#allocation12]] [#allocation25]
      %195 = sst [smem:[#allocation13]] [#allocation24]
    $region57: #{decoder_forward.2} parent=1 // pred_fallthru
      _
    %197 = shalt.err (0)
    %s199 = sshll.u32 %s190, 4
    %s200 = int_to_ptr.vmem [resolvable:$true] %s199
    %202 = dma.hbm_to_vmem [thread:$0]  %s189, 16, %s200, %s191
    %s203 = smul.addr %s99, 16
    %s204 = scalar_lea.hbm %s1, %s203
    %s205 = scalar_lea.vmem [#allocation2], 7
    %s206 = scalar_lea.sflag [#allocation3], 7
    // Predicated region
    $region58: #{decoder_forward.2} parent=1 // pred_check
      _
    $region59: #{decoder_forward.2} parent=1 // pred_check_branch
      %208 = sbr.rel target = $region61
    $region60: #{decoder_forward.2} parent=1 // pred_region
      %209 = sst [smem:[#allocation12]] [#allocation27]
      %210 = sst [smem:[#allocation13]] [#allocation26]
    $region61: #{decoder_forward.2} parent=1 // pred_fallthru
      _
    %212 = shalt.err (0)
    %s214 = sshll.u32 %s205, 4
    %s215 = int_to_ptr.vmem [resolvable:$true] %s214
    %217 = dma.hbm_to_vmem [thread:$0]  %s204, 16, %s215, %s206
    %v218 = vld [vmem:[%s5] sm:$0xff]
    %v219 = vld [vmem:[%s6] sm:$0xff]
    %v220 = vpack.c.bf16 %v218, %v218
    %v221 = vld [vmem:[#allocation8] sm:$0xff]
    %v222 = vld [vmem:[#allocation8 + $0x8] sm:$0xff]
    %v223 = vld [vmem:[#allocation8 + $0x10] sm:$0xff]
    %v224 = vld [vmem:[#allocation8 + $0x18] sm:$0xff]
    %v225 = vld [vmem:[#allocation8 + $0x20] sm:$0xff]
    %v226 = vld [vmem:[#allocation8 + $0x28] sm:$0xff]
    %v227 = vld [vmem:[#allocation8 + $0x30] sm:$0xff]
    %v228 = vld [vmem:[#allocation8 + $0x38] sm:$0xff]
    %v229 = vld [vmem:[#allocation8 + $0x40] sm:$0xff]
    %v230 = vld [vmem:[#allocation8 + $0x48] sm:$0xff]
    %v231 = vld [vmem:[#allocation8 + $0x50] sm:$0xff]
    %v232 = vld [vmem:[#allocation8 + $0x58] sm:$0xff]
    %v233 = vld [vmem:[#allocation8 + $0x60] sm:$0xff]
    %v234 = vld [vmem:[#allocation8 + $0x68] sm:$0xff]
    %v235 = vld [vmem:[#allocation8 + $0x70] sm:$0xff]
    %v236 = vld [vmem:[#allocation8 + $0x78] sm:$0xff]
    %v237 = vld [vmem:[#allocation8 + $0x80] sm:$0xff]
    %v238 = vld [vmem:[#allocation8 + $0x88] sm:$0xff]
    %v239 = vld [vmem:[#allocation8 + $0x90] sm:$0xff]
    %v240 = vld [vmem:[#allocation8 + $0x98] sm:$0xff]
    %v241 = vld [vmem:[#allocation8 + $0xa0] sm:$0xff]
    %v242 = vld [vmem:[#allocation8 + $0xa8] sm:$0xff]
    %v243 = vld [vmem:[#allocation8 + $0xb0] sm:$0xff]
    %v244 = vld [vmem:[#allocation8 + $0xb8] sm:$0xff]
    %v245 = vld [vmem:[#allocation8 + $0xc0] sm:$0xff]
    %v246 = vld [vmem:[#allocation8 + $0xc8] sm:$0xff]
    %v247 = vld [vmem:[#allocation8 + $0xd0] sm:$0xff]
    %v248 = vld [vmem:[#allocation8 + $0xd8] sm:$0xff]
    %v249 = vld [vmem:[#allocation8 + $0xe0] sm:$0xff]
    %v250 = vld [vmem:[#allocation8 + $0xe8] sm:$0xff]
    %v251 = vld [vmem:[#allocation8 + $0xf0] sm:$0xff]
    %v252 = vld [vmem:[#allocation8 + $0xf8] sm:$0xff]
    %v253 = vld [vmem:[%s4] sm:$0xf]
    %v255 = vlaneseq
    %v256 = vshrl.u32 %v255, 7
    %v257 = vsub.s32 0, %v256
    %v258 = vrot.slane %v253, %v257
    %v259 = vlaneseq
    %v260 = vshrl.u32 %v259, 7
    %v261 = vsub.s32 1, %v260
    %v262 = vrot.slane %v253, %v261
    %v263 = vlaneseq
    %v264 = vshrl.u32 %v263, 7
    %v265 = vsub.s32 2, %v264
    %v266 = vrot.slane %v253, %v265
    %v267 = vlaneseq
    %v268 = vshrl.u32 %v267, 7
    %v269 = vsub.s32 3, %v268
    %v270 = vrot.slane %v253, %v269
    %v307 = vunpack.c.l.b16 %v221
    %v308 = vunpack.c.h.b16 %v221
    %v309 = vunpack.c.l.b16 %v222
    %v310 = vunpack.c.h.b16 %v222
    %v311 = vunpack.c.l.b16 %v223
    %v312 = vunpack.c.h.b16 %v223
    %v313 = vunpack.c.l.b16 %v224
    %v314 = vunpack.c.h.b16 %v224
    %v315 = vunpack.c.l.b16 %v225
    %v316 = vunpack.c.h.b16 %v225
    %v317 = vunpack.c.l.b16 %v226
    %v318 = vunpack.c.h.b16 %v226
    %v319 = vunpack.c.l.b16 %v227
    %v320 = vunpack.c.h.b16 %v227
    %v321 = vunpack.c.l.b16 %v228
    %v322 = vunpack.c.h.b16 %v228
    %v323 = vunpack.c.l.b16 %v229
    %v324 = vunpack.c.h.b16 %v229
    %v325 = vunpack.c.l.b16 %v230
    %v326 = vunpack.c.h.b16 %v230
    %v327 = vunpack.c.l.b16 %v231
    %v328 = vunpack.c.h.b16 %v231
    %v329 = vunpack.c.l.b16 %v232
    %v330 = vunpack.c.h.b16 %v232
    %v331 = vunpack.c.l.b16 %v233
    %v332 = vunpack.c.h.b16 %v233
    %v333 = vunpack.c.l.b16 %v234
    %v334 = vunpack.c.h.b16 %v234
    %v335 = vunpack.c.l.b16 %v235
    %v336 = vunpack.c.h.b16 %v235
    %v337 = vunpack.c.l.b16 %v236
    %v338 = vunpack.c.h.b16 %v236
    %v339 = vunpack.c.l.b16 %v237
    %v340 = vunpack.c.h.b16 %v237
    %v341 = vunpack.c.l.b16 %v238
    %v342 = vunpack.c.h.b16 %v238
    %v343 = vunpack.c.l.b16 %v239
    %v344 = vunpack.c.h.b16 %v239
    %v345 = vunpack.c.l.b16 %v240
    %v346 = vunpack.c.h.b16 %v240
    %v347 = vunpack.c.l.b16 %v241
    %v348 = vunpack.c.h.b16 %v241
    %v349 = vunpack.c.l.b16 %v242
    %v350 = vunpack.c.h.b16 %v242
    %v351 = vunpack.c.l.b16 %v243
    %v352 = vunpack.c.h.b16 %v243
    %v353 = vunpack.c.l.b16 %v244
    %v354 = vunpack.c.h.b16 %v244
    %v355 = vunpack.c.l.b16 %v245
    %v356 = vunpack.c.h.b16 %v245
    %v357 = vunpack.c.l.b16 %v246
    %v358 = vunpack.c.h.b16 %v246
    %v359 = vunpack.c.l.b16 %v247
    %v360 = vunpack.c.h.b16 %v247
    %v361 = vunpack.c.l.b16 %v248
    %v362 = vunpack.c.h.b16 %v248
    %v363 = vunpack.c.l.b16 %v249
    %v364 = vunpack.c.h.b16 %v249
    %v365 = vunpack.c.l.b16 %v250
    %v366 = vunpack.c.h.b16 %v250
    %v367 = vunpack.c.l.b16 %v251
    %v368 = vunpack.c.h.b16 %v251
    %v369 = vunpack.c.l.b16 %v252
    %v370 = vunpack.c.h.b16 %v252
    %v371 = vpack.c.b16 %v311, %v307
    %v372 = vpack.c.b16 %v312, %v308
    %v373 = vpack.c.b16 %v313, %v309
    %v374 = vpack.c.b16 %v314, %v310
    %v375 = vpack.c.b16 %v319, %v315
    %v376 = vpack.c.b16 %v320, %v316
    %v377 = vpack.c.b16 %v321, %v317
    %v378 = vpack.c.b16 %v322, %v318
    %v379 = vpack.c.b16 %v327, %v323
    %v380 = vpack.c.b16 %v328, %v324
    %v381 = vpack.c.b16 %v329, %v325
    %v382 = vpack.c.b16 %v330, %v326
    %v383 = vpack.c.b16 %v335, %v331
    %v384 = vpack.c.b16 %v336, %v332
    %v385 = vpack.c.b16 %v337, %v333
    %v386 = vpack.c.b16 %v338, %v334
    %v387 = vpack.c.b16 %v343, %v339
    %v388 = vpack.c.b16 %v344, %v340
    %v389 = vpack.c.b16 %v345, %v341
    %v390 = vpack.c.b16 %v346, %v342
    %v391 = vpack.c.b16 %v351, %v347
    %v392 = vpack.c.b16 %v352, %v348
    %v393 = vpack.c.b16 %v353, %v349
    %v394 = vpack.c.b16 %v354, %v350
    %v395 = vpack.c.b16 %v359, %v355
    %v396 = vpack.c.b16 %v360, %v356
    %v397 = vpack.c.b16 %v361, %v357
    %v398 = vpack.c.b16 %v362, %v358
    %v399 = vpack.c.b16 %v367, %v363
    %v400 = vpack.c.b16 %v368, %v364
    %v401 = vpack.c.b16 %v369, %v365
    %v402 = vpack.c.b16 %v370, %v366
    %435 = vmatprep.subr.bf16.mxu0 %v400
    %436 = vmatpush1.bf16.msra.mxu0 %v399
    %437 = vmatprep.subr.bf16.mxu0 %v396
    %438 = vmatpush1.bf16.msra.mxu0 %v395
    %439 = vmatprep.subr.bf16.mxu0 %v392
    %440 = vmatpush1.bf16.msra.mxu0 %v391
    %441 = vmatprep.subr.bf16.mxu0 %v388
    %442 = vmatpush1.bf16.msra.mxu0 %v387
    %443 = vmatprep.subr.bf16.mxu0 %v384
    %444 = vmatpush1.bf16.msra.mxu0 %v383
    %445 = vmatprep.subr.bf16.mxu0 %v380
    %446 = vmatpush1.bf16.msra.mxu0 %v379
    %447 = vmatprep.subr.bf16.mxu0 %v376
    %448 = vmatpush1.bf16.msra.mxu0 %v375
    %449 = vmatprep.subr.bf16.mxu0 %v372
    %450 = vmatpush1.bf16.msra.mxu0 %v371
    %451 = vmatprep.subr.bf16.mxu0 0
    %452 = vmatpush2.bf16.msra.mxu0 0
    %453 = vmatprep.subr.bf16.mxu0 0
    %454 = vmatpush2.bf16.msra.mxu0 0
    %455 = vmatprep.subr.bf16.mxu0 0
    %456 = vmatpush2.bf16.msra.mxu0 0
    %457 = vmatprep.subr.bf16.mxu0 0
    %458 = vmatpush2.bf16.msra.mxu0 0
    %459 = vmatprep.subr.bf16.mxu0 0
    %460 = vmatpush2.bf16.msra.mxu0 0
    %461 = vmatprep.subr.bf16.mxu0 0
    %462 = vmatpush2.bf16.msra.mxu0 0
    %463 = vmatprep.subr.bf16.mxu0 0
    %464 = vmatpush2.bf16.msra.mxu0 0
    %465 = vmatprep.subr.bf16.mxu0 0
    %466 = vmatpush2.bf16.msra.mxu0 0
    %467 = vmatprep.mubr.bf16.mxu0 0
    %468 = vmatmul.mubr.bf16.gmra.mxu0 %v220
    %v469 = vpop.f32.mrf.mxu0
    %v470 = vadd.f32 %v258, %v469
    %v471 = vpop.f32.mrf.mxu0
    %v472 = vadd.f32 %v262, %v471
    %v473 = vpop.f32.mrf.mxu0
    %v474 = vpop.f32.mrf.mxu0
    %475 = vdwg.mxu0
    %476 = vmatprep.subr.bf16.mxu0 %v402
    %477 = vmatpush1.bf16.msra.mxu0 %v401
    %478 = vmatprep.subr.bf16.mxu0 %v398
    %479 = vmatpush1.bf16.msra.mxu0 %v397
    %480 = vmatprep.subr.bf16.mxu0 %v394
    %481 = vmatpush1.bf16.msra.mxu0 %v393
    %482 = vmatprep.subr.bf16.mxu0 %v390
    %483 = vmatpush1.bf16.msra.mxu0 %v389
    %484 = vmatprep.subr.bf16.mxu0 %v386
    %485 = vmatpush1.bf16.msra.mxu0 %v385
    %486 = vmatprep.subr.bf16.mxu0 %v382
    %487 = vmatpush1.bf16.msra.mxu0 %v381
    %488 = vmatprep.subr.bf16.mxu0 %v378
    %489 = vmatpush1.bf16.msra.mxu0 %v377
    %490 = vmatprep.subr.bf16.mxu0 %v374
    %491 = vmatpush1.bf16.msra.mxu0 %v373
    %492 = vmatprep.subr.bf16.mxu0 0
    %493 = vmatpush2.bf16.msra.mxu0 0
    %494 = vmatprep.subr.bf16.mxu0 0
    %495 = vmatpush2.bf16.msra.mxu0 0
    %496 = vmatprep.subr.bf16.mxu0 0
    %497 = vmatpush2.bf16.msra.mxu0 0
    %498 = vmatprep.subr.bf16.mxu0 0
    %499 = vmatpush2.bf16.msra.mxu0 0
    %500 = vmatprep.subr.bf16.mxu0 0
    %501 = vmatpush2.bf16.msra.mxu0 0
    %502 = vmatprep.subr.bf16.mxu0 0
    %503 = vmatpush2.bf16.msra.mxu0 0
    %504 = vmatprep.subr.bf16.mxu0 0
    %505 = vmatpush2.bf16.msra.mxu0 0
    %506 = vmatprep.subr.bf16.mxu0 0
    %507 = vmatpush2.bf16.msra.mxu0 0
    %508 = vmatprep.mubr.bf16.mxu0 0
    %509 = vmatmul.mubr.bf16.gmra.mxu0 %v220
    %v510 = vpop.f32.mrf.mxu0
    %v511 = vadd.f32 %v266, %v510
    %v512 = vpop.f32.mrf.mxu0
    %v513 = vadd.f32 %v270, %v512
    %v514 = vpop.f32.mrf.mxu0
    %v515 = vpop.f32.mrf.mxu0
    %516 = vdwg.mxu0
    %518 = dma.done [#allocation3], 16
    %520 = dma.done %s116, 16
    %522 = dma.done %s131, 16
    %524 = dma.done %s146, 16
    %526 = dma.done %s161, 16
    %528 = dma.done %s176, 16
    %530 = dma.done %s191, 16
    %532 = dma.done %s206, 16
    %v533 = vld [vmem:[#allocation2] sm:$0xff]
    %v534 = vpack.c.bf16 %v533, %v533
    %v535 = vld [vmem:[#allocation6] sm:$0xff]
    %v536 = vld [vmem:[#allocation6 + $0x8] sm:$0xff]
    %v537 = vld [vmem:[#allocation6 + $0x10] sm:$0xff]
    %v538 = vld [vmem:[#allocation6 + $0x18] sm:$0xff]
    %v539 = vld [vmem:[#allocation6 + $0x20] sm:$0xff]
    %v540 = vld [vmem:[#allocation6 + $0x28] sm:$0xff]
    %v541 = vld [vmem:[#allocation6 + $0x30] sm:$0xff]
    %v542 = vld [vmem:[#allocation6 + $0x38] sm:$0xff]
    %v543 = vld [vmem:[#allocation6 + $0x40] sm:$0xff]
    %v544 = vld [vmem:[#allocation6 + $0x48] sm:$0xff]
    %v545 = vld [vmem:[#allocation6 + $0x50] sm:$0xff]
    %v546 = vld [vmem:[#allocation6 + $0x58] sm:$0xff]
    %v547 = vld [vmem:[#allocation6 + $0x60] sm:$0xff]
    %v548 = vld [vmem:[#allocation6 + $0x68] sm:$0xff]
    %v549 = vld [vmem:[#allocation6 + $0x70] sm:$0xff]
    %v550 = vld [vmem:[#allocation6 + $0x78] sm:$0xff]
    %v551 = vld [vmem:[#allocation6 + $0x80] sm:$0xff]
    %v552 = vld [vmem:[#allocation6 + $0x88] sm:$0xff]
    %v553 = vld [vmem:[#allocation6 + $0x90] sm:$0xff]
    %v554 = vld [vmem:[#allocation6 + $0x98] sm:$0xff]
    %v555 = vld [vmem:[#allocation6 + $0xa0] sm:$0xff]
    %v556 = vld [vmem:[#allocation6 + $0xa8] sm:$0xff]
    %v557 = vld [vmem:[#allocation6 + $0xb0] sm:$0xff]
    %v558 = vld [vmem:[#allocation6 + $0xb8] sm:$0xff]
    %v559 = vld [vmem:[#allocation6 + $0xc0] sm:$0xff]
    %v560 = vld [vmem:[#allocation6 + $0xc8] sm:$0xff]
    %v561 = vld [vmem:[#allocation6 + $0xd0] sm:$0xff]
    %v562 = vld [vmem:[#allocation6 + $0xd8] sm:$0xff]
    %v563 = vld [vmem:[#allocation6 + $0xe0] sm:$0xff]
    %v564 = vld [vmem:[#allocation6 + $0xe8] sm:$0xff]
    %v565 = vld [vmem:[#allocation6 + $0xf0] sm:$0xff]
    %v566 = vld [vmem:[#allocation6 + $0xf8] sm:$0xff]
    %v599 = vunpack.c.l.b16 %v535
    %v600 = vunpack.c.h.b16 %v535
    %v601 = vunpack.c.l.b16 %v536
    %v602 = vunpack.c.h.b16 %v536
    %v603 = vunpack.c.l.b16 %v537
    %v604 = vunpack.c.h.b16 %v537
    %v605 = vunpack.c.l.b16 %v538
    %v606 = vunpack.c.h.b16 %v538
    %v607 = vunpack.c.l.b16 %v539
    %v608 = vunpack.c.h.b16 %v539
    %v609 = vunpack.c.l.b16 %v540
    %v610 = vunpack.c.h.b16 %v540
    %v611 = vunpack.c.l.b16 %v541
    %v612 = vunpack.c.h.b16 %v541
    %v613 = vunpack.c.l.b16 %v542
    %v614 = vunpack.c.h.b16 %v542
    %v615 = vunpack.c.l.b16 %v543
    %v616 = vunpack.c.h.b16 %v543
    %v617 = vunpack.c.l.b16 %v544
    %v618 = vunpack.c.h.b16 %v544
    %v619 = vunpack.c.l.b16 %v545
    %v620 = vunpack.c.h.b16 %v545
    %v621 = vunpack.c.l.b16 %v546
    %v622 = vunpack.c.h.b16 %v546
    %v623 = vunpack.c.l.b16 %v547
    %v624 = vunpack.c.h.b16 %v547
    %v625 = vunpack.c.l.b16 %v548
    %v626 = vunpack.c.h.b16 %v548
    %v627 = vunpack.c.l.b16 %v549
    %v628 = vunpack.c.h.b16 %v549
    %v629 = vunpack.c.l.b16 %v550
    %v630 = vunpack.c.h.b16 %v550
    %v631 = vunpack.c.l.b16 %v551
    %v632 = vunpack.c.h.b16 %v551
    %v633 = vunpack.c.l.b16 %v552
    %v634 = vunpack.c.h.b16 %v552
    %v635 = vunpack.c.l.b16 %v553
    %v636 = vunpack.c.h.b16 %v553
    %v637 = vunpack.c.l.b16 %v554
    %v638 = vunpack.c.h.b16 %v554
    %v639 = vunpack.c.l.b16 %v555
    %v640 = vunpack.c.h.b16 %v555
    %v641 = vunpack.c.l.b16 %v556
    %v642 = vunpack.c.h.b16 %v556
    %v643 = vunpack.c.l.b16 %v557
    %v644 = vunpack.c.h.b16 %v557
    %v645 = vunpack.c.l.b16 %v558
    %v646 = vunpack.c.h.b16 %v558
    %v647 = vunpack.c.l.b16 %v559
    %v648 = vunpack.c.h.b16 %v559
    %v649 = vunpack.c.l.b16 %v560
    %v650 = vunpack.c.h.b16 %v560
    %v651 = vunpack.c.l.b16 %v561
    %v652 = vunpack.c.h.b16 %v561
    %v653 = vunpack.c.l.b16 %v562
    %v654 = vunpack.c.h.b16 %v562
    %v655 = vunpack.c.l.b16 %v563
    %v656 = vunpack.c.h.b16 %v563
    %v657 = vunpack.c.l.b16 %v564
    %v658 = vunpack.c.h.b16 %v564
    %v659 = vunpack.c.l.b16 %v565
    %v660 = vunpack.c.h.b16 %v565
    %v661 = vunpack.c.l.b16 %v566
    %v662 = vunpack.c.h.b16 %v566
    %v663 = vpack.c.b16 %v603, %v599
    %v664 = vpack.c.b16 %v604, %v600
    %v665 = vpack.c.b16 %v605, %v601
    %v666 = vpack.c.b16 %v606, %v602
    %v667 = vpack.c.b16 %v611, %v607
    %v668 = vpack.c.b16 %v612, %v608
    %v669 = vpack.c.b16 %v613, %v609
    %v670 = vpack.c.b16 %v614, %v610
    %v671 = vpack.c.b16 %v619, %v615
    %v672 = vpack.c.b16 %v620, %v616
    %v673 = vpack.c.b16 %v621, %v617
    %v674 = vpack.c.b16 %v622, %v618
    %v675 = vpack.c.b16 %v627, %v623
    %v676 = vpack.c.b16 %v628, %v624
    %v677 = vpack.c.b16 %v629, %v625
    %v678 = vpack.c.b16 %v630, %v626
    %v679 = vpack.c.b16 %v635, %v631
    %v680 = vpack.c.b16 %v636, %v632
    %v681 = vpack.c.b16 %v637, %v633
    %v682 = vpack.c.b16 %v638, %v634
    %v683 = vpack.c.b16 %v643, %v639
    %v684 = vpack.c.b16 %v644, %v640
    %v685 = vpack.c.b16 %v645, %v641
    %v686 = vpack.c.b16 %v646, %v642
    %v687 = vpack.c.b16 %v651, %v647
    %v688 = vpack.c.b16 %v652, %v648
    %v689 = vpack.c.b16 %v653, %v649
    %v690 = vpack.c.b16 %v654, %v650
    %v691 = vpack.c.b16 %v659, %v655
    %v692 = vpack.c.b16 %v660, %v656
    %v693 = vpack.c.b16 %v661, %v657
    %v694 = vpack.c.b16 %v662, %v658
    %727 = vmatprep.subr.bf16.mxu0 %v692
    %728 = vmatpush1.bf16.msra.mxu0 %v691
    %729 = vmatprep.subr.bf16.mxu0 %v688
    %730 = vmatpush1.bf16.msra.mxu0 %v687
    %731 = vmatprep.subr.bf16.mxu0 %v684
    %732 = vmatpush1.bf16.msra.mxu0 %v683
    %733 = vmatprep.subr.bf16.mxu0 %v680
    %734 = vmatpush1.bf16.msra.mxu0 %v679
    %735 = vmatprep.subr.bf16.mxu0 %v676
    %736 = vmatpush1.bf16.msra.mxu0 %v675
    %737 = vmatprep.subr.bf16.mxu0 %v672
    %738 = vmatpush1.bf16.msra.mxu0 %v671
    %739 = vmatprep.subr.bf16.mxu0 %v668
    %740 = vmatpush1.bf16.msra.mxu0 %v667
    %741 = vmatprep.subr.bf16.mxu0 %v664
    %742 = vmatpush1.bf16.msra.mxu0 %v663
    %743 = vmatprep.subr.bf16.mxu0 0
    %744 = vmatpush2.bf16.msra.mxu0 0
    %745 = vmatprep.subr.bf16.mxu0 0
    %746 = vmatpush2.bf16.msra.mxu0 0
    %747 = vmatprep.subr.bf16.mxu0 0
    %748 = vmatpush2.bf16.msra.mxu0 0
    %749 = vmatprep.subr.bf16.mxu0 0
    %750 = vmatpush2.bf16.msra.mxu0 0
    %751 = vmatprep.subr.bf16.mxu0 0
    %752 = vmatpush2.bf16.msra.mxu0 0
    %753 = vmatprep.subr.bf16.mxu0 0
    %754 = vmatpush2.bf16.msra.mxu0 0
    %755 = vmatprep.subr.bf16.mxu0 0
    %756 = vmatpush2.bf16.msra.mxu0 0
    %757 = vmatprep.subr.bf16.mxu0 0
    %758 = vmatpush2.bf16.msra.mxu0 0
    %759 = vmatprep.mubr.bf16.mxu0 0
    %760 = vmatmul.mubr.bf16.gmra.mxu0 %v534
    %v761 = vpop.f32.mrf.mxu0
    %v762 = vadd.f32 0.0, %v761
    %v763 = vpop.f32.mrf.mxu0
    %v764 = vadd.f32 0.0, %v763
    %v765 = vpop.f32.mrf.mxu0
    %v766 = vpop.f32.mrf.mxu0
    %767 = vdwg.mxu0
    %768 = vmatprep.subr.bf16.mxu0 %v694
    %769 = vmatpush1.bf16.msra.mxu0 %v693
    %770 = vmatprep.subr.bf16.mxu0 %v690
    %771 = vmatpush1.bf16.msra.mxu0 %v689
    %772 = vmatprep.subr.bf16.mxu0 %v686
    %773 = vmatpush1.bf16.msra.mxu0 %v685
    %774 = vmatprep.subr.bf16.mxu0 %v682
    %775 = vmatpush1.bf16.msra.mxu0 %v681
    %776 = vmatprep.subr.bf16.mxu0 %v678
    %777 = vmatpush1.bf16.msra.mxu0 %v677
    %778 = vmatprep.subr.bf16.mxu0 %v674
    %779 = vmatpush1.bf16.msra.mxu0 %v673
    %780 = vmatprep.subr.bf16.mxu0 %v670
    %781 = vmatpush1.bf16.msra.mxu0 %v669
    %782 = vmatprep.subr.bf16.mxu0 %v666
    %783 = vmatpush1.bf16.msra.mxu0 %v665
    %784 = vmatprep.subr.bf16.mxu0 0
    %785 = vmatpush2.bf16.msra.mxu0 0
    %786 = vmatprep.subr.bf16.mxu0 0
    %787 = vmatpush2.bf16.msra.mxu0 0
    %788 = vmatprep.subr.bf16.mxu0 0
    %789 = vmatpush2.bf16.msra.mxu0 0
    %790 = vmatprep.subr.bf16.mxu0 0
    %791 = vmatpush2.bf16.msra.mxu0 0
    %792 = vmatprep.subr.bf16.mxu0 0
    %793 = vmatpush2.bf16.msra.mxu0 0
    %794 = vmatprep.subr.bf16.mxu0 0
    %795 = vmatpush2.bf16.msra.mxu0 0
    %796 = vmatprep.subr.bf16.mxu0 0
    %797 = vmatpush2.bf16.msra.mxu0 0
    %798 = vmatprep.subr.bf16.mxu0 0
    %799 = vmatpush2.bf16.msra.mxu0 0
    %800 = vmatprep.mubr.bf16.mxu0 0
    %801 = vmatmul.mubr.bf16.gmra.mxu0 %v534
    %v802 = vpop.f32.mrf.mxu0
    %v803 = vadd.f32 0.0, %v802
    %v804 = vpop.f32.mrf.mxu0
    %v805 = vadd.f32 0.0, %v804
    %v806 = vpop.f32.mrf.mxu0
    %v807 = vpop.f32.mrf.mxu0
    %808 = vdwg.mxu0
    %v809 = vadd.f32 %v470, %v762
    %v810 = vadd.f32 %v472, %v764
    %v811 = vadd.f32 %v511, %v803
    %v812 = vadd.f32 %v513, %v805
    %v813 = vxor.u32 %v809, 2147483648
    %v814 = vmul.f32 %v813, 1.442695
    %v815 = vpow.pop %v814
    %v816 = vadd.f32 %v815, 1.0
    %v817 = vrcp.pop %v816
    %v818 = vmul.f32 1.0, %v817
    %v819 = vxor.u32 %v810, 2147483648
    %v820 = vmul.f32 %v819, 1.442695
    %v821 = vpow.pop %v820
    %v822 = vadd.f32 %v821, 1.0
    %v823 = vrcp.pop %v822
    %v824 = vmul.f32 1.0, %v823
    %v825 = vtanh.pop %v811
    %v826 = vxor.u32 %v812, 2147483648
    %v827 = vmul.f32 %v826, 1.442695
    %v828 = vpow.pop %v827
    %v829 = vadd.f32 %v828, 1.0
    %v830 = vrcp.pop %v829
    %v831 = vmul.f32 1.0, %v830
    %v832 = vmul.f32 %v824, %v219
    %v833 = vmul.f32 %v818, %v825
    %v834 = vadd.f32 %v832, %v833
    %v835 = vtanh.pop %v834
    %v836 = vmul.f32 %v831, %v835
    %837 = vst [vmem:[%s7] sm:$0xff] %v836
    %838 = vst [vmem:[%s8] sm:$0xff] %v834
    %v839 = vpack.c.bf16 %v836, %v836
    %840 = vst [vmem:[%s9] sm:$0xf] %v839
    // Predicated region
    $region62: #{decoder_forward.2} parent=1 // pred_check
      _
    $region63: #{decoder_forward.2} parent=1 // pred_check_branch
      %842 = sbr.rel (0) target = $region65
    $region64: #{decoder_forward.2} parent=1 // pred_region
      _
    $region65: #{decoder_forward.2} parent=1 // pred_fallthru
      _
    // Predicated region
    $region66: #{decoder_forward.2} parent=1 // pred_check
      _
    $region67: #{decoder_forward.2} parent=1 // pred_check_branch
      %844 = sbr.rel (0) target = $region69
    $region68: #{decoder_forward.2} parent=1 // pred_region
      _
    $region69: #{decoder_forward.2} parent=1 // pred_fallthru
      _
    // Predicated region
    $region70: #{decoder_forward.2} parent=1 // pred_check
      _
    $region71: #{decoder_forward.2} parent=1 // pred_check_branch
      %846 = sbr.rel (0) target = $region73
    $region72: #{decoder_forward.2} parent=1 // pred_region
      _
    $region73: #{decoder_forward.2} parent=1 // pred_fallthru
      _
    // Predicated region
    $region74: #{decoder_forward.2} parent=1 // pred_check
      _
    $region75: #{decoder_forward.2} parent=1 // pred_check_branch
      %848 = sbr.rel (0) target = $region77
    $region76: #{decoder_forward.2} parent=1 // pred_region
      _
    $region77: #{decoder_forward.2} parent=1 // pred_fallthru
      _
    // Predicated region
    $region78: #{decoder_forward.2} parent=1 // pred_check
      _
    $region79: #{decoder_forward.2} parent=1 // pred_check_branch
      %850 = sbr.rel (0) target = $region81
    $region80: #{decoder_forward.2} parent=1 // pred_region
      _
    $region81: #{decoder_forward.2} parent=1 // pred_fallthru
      _
    // Predicated region
    $region82: #{decoder_forward.2} parent=1 // pred_check
      _
    $region83: #{decoder_forward.2} parent=1 // pred_check_branch
      %852 = sbr.rel (0) target = $region85
    $region84: #{decoder_forward.2} parent=1 // pred_region
      _
    $region85: #{decoder_forward.2} parent=1 // pred_fallthru
      _
    %853 = vsyncpa [#allocation7], 1
    %854 = vsyncpa [#allocation9], 1
  %855 = vsyncmov [#allocation3]
  %s856 = vpop.sfrf %855
  %p857 = scmp.eq.s32.totalorder %s856, 0
  %p858 = pneg %p857
  %860 = shalt.err (%p858)
  %s861 = scalar_lea.sflag [#allocation3], 1
  %862 = vsyncmov %s861
  %s863 = vpop.sfrf %862
  %p864 = scmp.eq.s32.totalorder %s863, 0
  %p865 = pneg %p864
  %867 = shalt.err (%p865)
  %s868 = scalar_lea.sflag [#allocation3], 2
  %869 = vsyncmov %s868
  %s870 = vpop.sfrf %869
  %p871 = scmp.eq.s32.totalorder %s870, 0
  %p872 = pneg %p871
  %874 = shalt.err (%p872)
  %s875 = scalar_lea.sflag [#allocation3], 3
  %876 = vsyncmov %s875
  %s877 = vpop.sfrf %876
  %p878 = scmp.eq.s32.totalorder %s877, 0
  %p879 = pneg %p878
  %881 = shalt.err (%p879)
  %s882 = scalar_lea.sflag [#allocation3], 4
  %883 = vsyncmov %s882
  %s884 = vpop.sfrf %883
  %p885 = scmp.eq.s32.totalorder %s884, 0
  %p886 = pneg %p885
  %888 = shalt.err (%p886)
  %s889 = scalar_lea.sflag [#allocation3], 5
  %890 = vsyncmov %s889
  %s891 = vpop.sfrf %890
  %p892 = scmp.eq.s32.totalorder %s891, 0
  %p893 = pneg %p892
  %895 = shalt.err (%p893)
  %s896 = scalar_lea.sflag [#allocation3], 6
  %897 = vsyncmov %s896
  %s898 = vpop.sfrf %897
  %p899 = scmp.eq.s32.totalorder %s898, 0
  %p900 = pneg %p899
  %902 = shalt.err (%p900)
  %s903 = scalar_lea.sflag [#allocation3], 7
  %904 = vsyncmov %s903
  %s905 = vpop.sfrf %904
  %p906 = scmp.eq.s32.totalorder %s905, 0
  %p907 = pneg %p906
  %909 = shalt.err (%p907)

</llo_original>
